<compile_context>
chip_gen: v7x
topology: tpu7x:2x2x1
jax: 0.10.0
libtpu: 0.0.40
codegen_flags: <defaults>
</compile_context>

<pallas_src>
import functools

import jax
import jax.numpy as jnp
import numpy as np
from jax.experimental import pallas as pl
from jax.experimental.pallas import tpu as pltpu

_ENC_D = 4  # Encoder(d=4)


def _snake(x):
    s = jnp.sin(x)
    return x + s * s


def _mlp_kernel(*refs, n_layers: int, encode: bool):
    """Feature-major MLP tile: activations are (features, TM); batch sits on lanes."""
    o_ref = refs[-1]
    if encode:
        x_ref, pows_ref, phase_ref = refs[0], refs[1], refs[2]
        param_refs = refs[3:-1]
        # row 2j   = cos(pows[j] * x)                       (phase 0)
        # row 2j+1 = cos(pows[j] * x - pi/2) = sin(pows[j]*x)
        h = jnp.cos(pows_ref[...] * x_ref[...] + phase_ref[...])   # (2d, TM)
    else:
        x_ref = refs[0]
        param_refs = refs[1:-1]
        h = x_ref[...]                                             # (d_in, TM)

    for i in range(n_layers):
        w = param_refs[2 * i][...]         # (d_out, d_in)  == PyTorch weight layout
        b = param_refs[2 * i + 1][...]     # (d_out, 1)
        h = jnp.dot(w, h, preferred_element_type=jnp.float32) + b  # (d_out, TM)
        if i < n_layers - 1:               # Snake after input + each hidden layer
            h = _snake(h)
    o_ref[...] = h.astype(o_ref.dtype)


def init_neuralnet_params(key, input_dimension, output_dimension, n_hidden_layers,
                          neurons, encode=False):
    """PyTorch-style U(-1/sqrt(fan_in), 1/sqrt(fan_in)) init. w: (fan_in, fan_out), b: (1, fan_out)."""
    in_dim = 2 * _ENC_D if encode else input_dimension
    dims = [in_dim] + [neurons] * n_hidden_layers + [output_dimension]
    params = []
    for i in range(len(dims) - 1):
        fan_in, fan_out = dims[i], dims[i + 1]
        key, kw, kb = jax.random.split(key, 3)
        bound = 1.0 / np.sqrt(fan_in)
        w = jax.random.uniform(kw, (fan_in, fan_out), jnp.float32, -bound, bound)
        b = jax.random.uniform(kb, (1, fan_out), jnp.float32, -bound, bound)
        params.append((w, b))
    return params


def neuralnet_forward(x, params, encode=False, block_m=1024):
    """Pallas forward. x: (N, D_in). Returns (N, out_dim)."""
    n_layers = len(params)
    n, d_in_raw = x.shape
    out_dim = params[-1][0].shape[1]

    block_m = max(128, int(block_m))
    n_blocks = pl.cdiv(n, block_m)
    n_pad = n_blocks * block_m

    # Feature-major layout: (D_in, N), padded along the batch (lane) axis.
    x_t = jnp.asarray(x, jnp.float32).T
    if n_pad != n:
        x_t = jnp.pad(x_t, ((0, 0), (0, n_pad - n)))

    inputs = [x_t]
    in_specs = [pl.BlockSpec((x_t.shape[0], block_m), lambda i: (0, i))]

    if encode:
        d = _ENC_D
        pows = np.repeat(np.array([np.pi * 2.0 ** j for j in range(d)], np.float32), 2)
        phase = np.tile(np.array([0.0, -np.pi / 2.0], np.float32), d)
        pows_col = jnp.asarray(pows.reshape(2 * d, 1))
        phase_col = jnp.asarray(phase.reshape(2 * d, 1))
        inputs += [pows_col, phase_col]
        in_specs += [pl.BlockSpec((2 * d, 1), lambda i: (0, 0)),
                     pl.BlockSpec((2 * d, 1), lambda i: (0, 0))]

    # Weights/biases: feature-major (d_out, d_in) / (d_out, 1), constant index_map => resident.
    for w, b in params:
        w_fm = jnp.asarray(w, jnp.float32).T
        b_fm = jnp.asarray(b, jnp.float32).reshape(-1, 1)
        inputs += [w_fm, b_fm]
        in_specs += [pl.BlockSpec(w_fm.shape, lambda i: (0, 0)),
                     pl.BlockSpec(b_fm.shape, lambda i: (0, 0))]

    # Advisory cost estimate for XLA's scheduler.
    dims = [2 * _ENC_D if encode else d_in_raw] + [w.shape[1] for w, _ in params]
    flops = 2 * n * sum(a * b for a, b in zip(dims[:-1], dims[1:]))
    transcendentals = n * sum(dims[1:-1]) + (n * 2 * _ENC_D if encode else 0)
    bytes_accessed = 4 * (n * (d_in_raw + out_dim)
                          + sum(w.size + b.size for w, b in params))

    kernel = functools.partial(_mlp_kernel, n_layers=n_layers, encode=encode)
    out_t = pl.pallas_call(
        kernel,
        grid=(n_blocks,),
        out_shape=jax.ShapeDtypeStruct((out_dim, n_pad), jnp.float32),
        in_specs=in_specs,
        out_specs=pl.BlockSpec((out_dim, block_m), lambda i: (0, i)),
        compiler_params=pltpu.CompilerParams(dimension_semantics=("parallel",)),
        cost_estimate=pl.CostEstimate(flops=int(flops),
                                      transcendentals=int(transcendentals),
                                      bytes_accessed=int(bytes_accessed)),
    )(*inputs)

    return out_t[:, :n].T


def neuralnet_forward_ref(x, params, encode=False):
    """Pure-JAX reference (matches PyTorch NeuralNet.forward)."""
    h = x
    if encode:
        pows = jnp.asarray([np.pi * 2.0 ** j for j in range(_ENC_D)], dtype=jnp.float32)
        ang = h * pows[None, :]                                   # assumes D_in == 1
        enc = jnp.stack([jnp.cos(ang), jnp.sin(ang)], axis=-1).reshape(h.shape[0], 2 * _ENC_D)
        h = enc
    for i, (w, b) in enumerate(params):
        h = h @ w + b
        if i < len(params) - 1:
            h = h + jnp.sin(h) ** 2
    return h


if __name__ == "__main__":
    key = jax.random.PRNGKey(0)
    k1, k2, k3, k4 = jax.random.split(key, 4)

    # Case 1: module defaults (encode=False), batch spans multiple grid tiles (with padding).
    input_dimension, output_dimension = 2, 1
    n_hidden_layers, neurons = 3, 32
    batch, block_m = 300, 128

    x = jax.random.uniform(k1, (batch, input_dimension), jnp.float32, -1.0, 1.0)
    params = init_neuralnet_params(k2, input_dimension, output_dimension,
                                   n_hidden_layers, neurons, encode=False)
    y = jax.block_until_ready(neuralnet_forward(x, params, encode=False, block_m=block_m))
    y_ref = neuralnet_forward_ref(x, params, encode=False)
    assert y.shape == (batch, output_dimension), y.shape
    assert np.allclose(np.asarray(y), np.asarray(y_ref), atol=1e-5, rtol=1e-5)

    # Case 2: encode=True (Encoder's broadcast semantics assume a scalar input per sample).
    x1 = jax.random.uniform(k3, (batch, 1), jnp.float32, -1.0, 1.0)
    params_e = init_neuralnet_params(k4, 1, output_dimension,
                                     n_hidden_layers, neurons, encode=True)
    y_e = jax.block_until_ready(neuralnet_forward(x1, params_e, encode=True, block_m=block_m))
    y_e_ref = neuralnet_forward_ref(x1, params_e, encode=True)
    assert y_e.shape == (batch, output_dimension), y_e.shape
    assert np.allclose(np.asarray(y_e), np.asarray(y_e_ref), atol=1e-5, rtol=1e-5)

    print("KERNEL_OK")
</pallas_src>

<mosaic_0001>
module attributes {stable_mosaic.version = 11 : i64} {
  func.func @_mlp_kernel(%arg0: i32, %arg1: memref<2x128xf32, #tpu.memory_space<vmem>>, %arg2: memref<32x2xf32, #tpu.memory_space<vmem>>, %arg3: memref<32x1xf32, #tpu.memory_space<vmem>>, %arg4: memref<32x32xf32, #tpu.memory_space<vmem>>, %arg5: memref<32x1xf32, #tpu.memory_space<vmem>>, %arg6: memref<32x32xf32, #tpu.memory_space<vmem>>, %arg7: memref<32x1xf32, #tpu.memory_space<vmem>>, %arg8: memref<1x32xf32, #tpu.memory_space<vmem>>, %arg9: memref<1x1xf32, #tpu.memory_space<vmem>>, %arg10: memref<1x128xf32, #tpu.memory_space<vmem>>) attributes {dimension_semantics = [#tpu.dimension_semantics<parallel>], iteration_bounds = array<i64: 3>, scalar_prefetch = 0 : i64, scratch_operands = 0 : i64, tpu.core_type = #tpu.core_type<tc>, window_params = [{transform_indices = @transform_0, window_bounds = array<i64: 2, 128>}, {pipeline_mode = #tpu.pipeline_mode<synchronous>, transform_indices = @transform_1, window_bounds = array<i64: 32, 2>}, {pipeline_mode = #tpu.pipeline_mode<synchronous>, transform_indices = @transform_2, window_bounds = array<i64: 32, 1>}, {pipeline_mode = #tpu.pipeline_mode<synchronous>, transform_indices = @transform_3, window_bounds = array<i64: 32, 32>}, {pipeline_mode = #tpu.pipeline_mode<synchronous>, transform_indices = @transform_4, window_bounds = array<i64: 32, 1>}, {pipeline_mode = #tpu.pipeline_mode<synchronous>, transform_indices = @transform_5, window_bounds = array<i64: 32, 32>}, {pipeline_mode = #tpu.pipeline_mode<synchronous>, transform_indices = @transform_6, window_bounds = array<i64: 32, 1>}, {pipeline_mode = #tpu.pipeline_mode<synchronous>, transform_indices = @transform_7, window_bounds = array<i64: 1, 32>}, {pipeline_mode = #tpu.pipeline_mode<synchronous>, transform_indices = @transform_8, window_bounds = array<i64: 1, 1>}, {transform_indices = @transform_9, window_bounds = array<i64: 1, 128>}]} {
    %c0 = arith.constant 0 : index
    %c0_0 = arith.constant 0 : index
    %0 = vector.load %arg1[%c0, %c0_0] : memref<2x128xf32, #tpu.memory_space<vmem>>, vector<2x128xf32>
    %c0_1 = arith.constant 0 : index
    %c0_2 = arith.constant 0 : index
    %1 = vector.load %arg2[%c0_1, %c0_2] : memref<32x2xf32, #tpu.memory_space<vmem>>, vector<32x2xf32>
    %c0_3 = arith.constant 0 : index
    %c0_4 = arith.constant 0 : index
    %2 = vector.load %arg3[%c0_3, %c0_4] : memref<32x1xf32, #tpu.memory_space<vmem>>, vector<32x1xf32>
    %cst = arith.constant dense<0.000000e+00> : vector<32x128xf32>
    %3 = tpu.matmul %1, %0, %cst {dimension_numbers = #tpu.dot_dimension_numbers<[1], [0], [0], [1], [0, 0, 1, 1], [], []>} : vector<32x2xf32>, vector<2x128xf32>, vector<32x128xf32> -> vector<32x128xf32>
    %4 = vector.broadcast %2 : vector<32x1xf32> to vector<32x128xf32>
    %5 = arith.addf %3, %4 : vector<32x128xf32>
    %6 = math.sin %5 : vector<32x128xf32>
    %7 = arith.mulf %6, %6 : vector<32x128xf32>
    %8 = arith.addf %5, %7 : vector<32x128xf32>
    %c0_5 = arith.constant 0 : index
    %c0_6 = arith.constant 0 : index
    %9 = vector.load %arg4[%c0_5, %c0_6] : memref<32x32xf32, #tpu.memory_space<vmem>>, vector<32x32xf32>
    %c0_7 = arith.constant 0 : index
    %c0_8 = arith.constant 0 : index
    %10 = vector.load %arg5[%c0_7, %c0_8] : memref<32x1xf32, #tpu.memory_space<vmem>>, vector<32x1xf32>
    %cst_9 = arith.constant dense<0.000000e+00> : vector<32x128xf32>
    %11 = tpu.matmul %9, %8, %cst_9 {dimension_numbers = #tpu.dot_dimension_numbers<[1], [0], [0], [1], [0, 0, 1, 1], [], []>} : vector<32x32xf32>, vector<32x128xf32>, vector<32x128xf32> -> vector<32x128xf32>
    %12 = vector.broadcast %10 : vector<32x1xf32> to vector<32x128xf32>
    %13 = arith.addf %11, %12 : vector<32x128xf32>
    %14 = math.sin %13 : vector<32x128xf32>
    %15 = arith.mulf %14, %14 : vector<32x128xf32>
    %16 = arith.addf %13, %15 : vector<32x128xf32>
    %c0_10 = arith.constant 0 : index
    %c0_11 = arith.constant 0 : index
    %17 = vector.load %arg6[%c0_10, %c0_11] : memref<32x32xf32, #tpu.memory_space<vmem>>, vector<32x32xf32>
    %c0_12 = arith.constant 0 : index
    %c0_13 = arith.constant 0 : index
    %18 = vector.load %arg7[%c0_12, %c0_13] : memref<32x1xf32, #tpu.memory_space<vmem>>, vector<32x1xf32>
    %cst_14 = arith.constant dense<0.000000e+00> : vector<32x128xf32>
    %19 = tpu.matmul %17, %16, %cst_14 {dimension_numbers = #tpu.dot_dimension_numbers<[1], [0], [0], [1], [0, 0, 1, 1], [], []>} : vector<32x32xf32>, vector<32x128xf32>, vector<32x128xf32> -> vector<32x128xf32>
    %20 = vector.broadcast %18 : vector<32x1xf32> to vector<32x128xf32>
    %21 = arith.addf %19, %20 : vector<32x128xf32>
    %22 = math.sin %21 : vector<32x128xf32>
    %23 = arith.mulf %22, %22 : vector<32x128xf32>
    %24 = arith.addf %21, %23 : vector<32x128xf32>
    %c0_15 = arith.constant 0 : index
    %c0_16 = arith.constant 0 : index
    %25 = vector.load %arg8[%c0_15, %c0_16] : memref<1x32xf32, #tpu.memory_space<vmem>>, vector<1x32xf32>
    %c0_17 = arith.constant 0 : index
    %c0_18 = arith.constant 0 : index
    %26 = vector.load %arg9[%c0_17, %c0_18] : memref<1x1xf32, #tpu.memory_space<vmem>>, vector<1x1xf32>
    %cst_19 = arith.constant dense<0.000000e+00> : vector<1x128xf32>
    %27 = tpu.matmul %25, %24, %cst_19 {dimension_numbers = #tpu.dot_dimension_numbers<[1], [0], [0], [1], [0, 0, 1, 1], [], []>} : vector<1x32xf32>, vector<32x128xf32>, vector<1x128xf32> -> vector<1x128xf32>
    %28 = vector.broadcast %26 : vector<1x1xf32> to vector<1x128xf32>
    %29 = arith.addf %27, %28 : vector<1x128xf32>
    %c0_20 = arith.constant 0 : index
    %c0_21 = arith.constant 0 : index
    %30 = vector.load %arg10[%c0_20, %c0_21] : memref<1x128xf32, #tpu.memory_space<vmem>>, vector<1x128xf32>
    tpu.vector_store %arg10[%c0_20, %c0_21], %29 {strides = array<i32>} : memref<1x128xf32, #tpu.memory_space<vmem>>, vector<1x128xf32>,
    return
  }
  func.func @transform_0(%arg0: i32) -> (i32, i32) {
    %c0_i32 = arith.constant 0 : i32
    %c0_i32_0 = arith.constant 0 : i32
    return %c0_i32, %arg0 : i32, i32
  }
  func.func @transform_1(%arg0: i32) -> (i32, i32) {
    %c0_i32 = arith.constant 0 : i32
    %c0_i32_0 = arith.constant 0 : i32
    %c0_i32_1 = arith.constant 0 : i32
    return %c0_i32, %c0_i32_0 : i32, i32
  }
  func.func @transform_2(%arg0: i32) -> (i32, i32) {
    %c0_i32 = arith.constant 0 : i32
    %c0_i32_0 = arith.constant 0 : i32
    %c0_i32_1 = arith.constant 0 : i32
    return %c0_i32, %c0_i32_0 : i32, i32
  }
  func.func @transform_3(%arg0: i32) -> (i32, i32) {
    %c0_i32 = arith.constant 0 : i32
    %c0_i32_0 = arith.constant 0 : i32
    %c0_i32_1 = arith.constant 0 : i32
    return %c0_i32, %c0_i32_0 : i32, i32
  }
  func.func @transform_4(%arg0: i32) -> (i32, i32) {
    %c0_i32 = arith.constant 0 : i32
    %c0_i32_0 = arith.constant 0 : i32
    %c0_i32_1 = arith.constant 0 : i32
    return %c0_i32, %c0_i32_0 : i32, i32
  }
  func.func @transform_5(%arg0: i32) -> (i32, i32) {
    %c0_i32 = arith.constant 0 : i32
    %c0_i32_0 = arith.constant 0 : i32
    %c0_i32_1 = arith.constant 0 : i32
    return %c0_i32, %c0_i32_0 : i32, i32
  }
  func.func @transform_6(%arg0: i32) -> (i32, i32) {
    %c0_i32 = arith.constant 0 : i32
    %c0_i32_0 = arith.constant 0 : i32
    %c0_i32_1 = arith.constant 0 : i32
    return %c0_i32, %c0_i32_0 : i32, i32
  }
  func.func @transform_7(%arg0: i32) -> (i32, i32) {
    %c0_i32 = arith.constant 0 : i32
    %c0_i32_0 = arith.constant 0 : i32
    %c0_i32_1 = arith.constant 0 : i32
    return %c0_i32, %c0_i32_0 : i32, i32
  }
  func.func @transform_8(%arg0: i32) -> (i32, i32) {
    %c0_i32 = arith.constant 0 : i32
    %c0_i32_0 = arith.constant 0 : i32
    %c0_i32_1 = arith.constant 0 : i32
    return %c0_i32, %c0_i32_0 : i32, i32
  }
  func.func @transform_9(%arg0: i32) -> (i32, i32) {
    %c0_i32 = arith.constant 0 : i32
    %c0_i32_0 = arith.constant 0 : i32
    return %c0_i32, %arg0 : i32, i32
  }
}

</mosaic_0001>

<llo_original>
// kernel: tpu_custom_call.1
$region0: #{tpu_custom_call.1}
  #allocation0 [shape = 'u32[]', space=smem, size = 0x4, offset = 0x4, fixed_abs, tag = 'smem constant byte address 0x4 - core index']
  #allocation1 [shape = 'u32[144,128]{1,0:T(1,128)}', space=vmem, size = 0x12000, scoped, tag = 'internal scratch']
  #allocation2 [shape = 'f32[1,1]{1,0:T(1,128)S(1)}', space=vmem, size = 0x200, scoped, tag = 'scoped memory for tpu_custom_call.1']
  %s0 = inlined_call_operand.vmem [shape: f32[2,384], index: 0, kind: input, shape index: {}]
  %s1 = inlined_call_operand.vmem [shape: f32[32,2], index: 1, kind: input, shape index: {}]
  %s2 = inlined_call_operand.vmem [shape: f32[32,1], index: 2, kind: input, shape index: {}]
  %s3 = inlined_call_operand.vmem [shape: f32[32,32], index: 3, kind: input, shape index: {}]
  %s4 = inlined_call_operand.vmem [shape: f32[32,1], index: 4, kind: input, shape index: {}]
  %s5 = inlined_call_operand.vmem [shape: f32[32,32], index: 5, kind: input, shape index: {}]
  %s6 = inlined_call_operand.vmem [shape: f32[32,1], index: 6, kind: input, shape index: {}]
  %s7 = inlined_call_operand.vmem [shape: f32[1,32], index: 7, kind: input, shape index: {}]
  %s8 = inlined_call_operand.<no memory space> [shape: f32[1,1], index: 8, kind: input, shape index: {}]
  %s9 = inlined_call_operand.hbm [shape: f32[1,384], index: 9, kind: output, shape index: {}]
  %s10 = sld [smem:[#allocation0]]
  $region69: #{tpu_custom_call.1} parent=0
    _
  %s12 = ssub.s32 1, %s10
  %s13 = scalar_select 0, %s12, %s10
  %v14 = vstv %s8
  %15 = vst [vmem:[#allocation2] sm:$0x1] %v14
  $region1: #{tpu_custom_call.1} parent=0
    #allocation3 [shape = 'u8[1024]{0}', space=vmem, size = 0x400, scoped, tag = 'output window, operand 0']
    #allocation4 [shape = 's32[2]{0}', space=sflag, size = 0x8, scoped, tag = 'scoped memory for tpu_custom_call.1']
    %16 = vsyncpa [#allocation4], 0
    %s17 = scalar_lea.sflag [#allocation4], 1
    %18 = vsyncpa %s17, 0
    loop: start=0, step=1, limit=5
    $region2: #{tpu_custom_call.1} parent=1 // loop_pre_header
      _
    $region3: #{tpu_custom_call.1} parent=1 // loop_header
      %s20 = sphi 0, %s24
      %p21 = scmp.ge.s32.totalorder %s20, 5
      %s30 = sphi 0, %s32
      %s33 = sphi 0, %s30
      %s34 = sphi 0, %s33
      %s50 = sphi 0, %s34
      %s54 = sphi 0, %s54
      %s56 = sphi 0, %s54
      %s57 = sphi 0, %s56
      %s71 = sphi 0, %s57
      %s75 = sphi 0, %s75
      %s77 = sphi 0, %s75
      %s78 = sphi 0, %s77
      %s92 = sphi 0, %s78
      %s96 = sphi 0, %s96
      %s98 = sphi 0, %s96
      %s99 = sphi 0, %s98
      %s113 = sphi 0, %s99
      %s117 = sphi 0, %s117
      %s119 = sphi 0, %s117
      %s120 = sphi 0, %s119
      %s134 = sphi 0, %s120
      %s138 = sphi 0, %s138
      %s140 = sphi 0, %s138
      %s141 = sphi 0, %s140
      %s155 = sphi 0, %s141
      %s159 = sphi 0, %s159
      %s161 = sphi 0, %s159
      %s162 = sphi 0, %s161
      %s176 = sphi 0, %s162
      %s180 = sphi 0, %s180
      %s182 = sphi 0, %s180
      %s183 = sphi 0, %s182
      %s197 = sphi 0, %s183
      %s201 = sphi 0, %s201
      %s203 = sphi 0, %s201
      %s204 = sphi 0, %s203
      %s218 = sphi 0, %s204
      %s224 = sphi 0, %s226
      %s227 = sphi 0, %s224
      %s228 = sphi 0, %s227
      %s244 = sphi 0, %s228
    $region4: #{tpu_custom_call.1} parent=1 // loop_header_branch
      %23 = sbr.rel (%p21) target = $region8
    $region5: #{tpu_custom_call.1} parent=1 // loop_body
      %s25 = ssub.s32 %s20, 1
      %s26 = ssub.s32 %s20, 2
      %s27 = sadd.s32 %s20, 1
      %s28 = ssub.s32 %s20, %s27
      %p29 = scmp.eq.s32.totalorder %s28, 0
      %s31 = sadd.s32 %s30, 1
      %s32 = scalar_select %p29, %s30, %s31
      %p35 = pneg %p29
      %p36 = scmp.eq.s32.totalorder %s20, 2
      %p37 = por %p35, %p36
      %p38 = scmp.ne.s32.totalorder %s30, %s33
      %p39 = scmp.eq.s32.totalorder %s20, 0
      %p40 = por %p38, %p39
      %p41 = scmp.ne.s32.totalorder %s30, %s33
      %p42 = scmp.eq.s32.totalorder %s25, 2
      %p43 = por %p41, %p42
      %p44 = scmp.ne.s32.totalorder %s33, %s34
      %p45 = scmp.eq.s32.totalorder %s25, 0
      %p46 = por %p44, %p45
      %p47 = scmp.ne.s32.totalorder %s33, %s34
      %p48 = scmp.eq.s32.totalorder %s26, 2
      %p49 = por %p47, %p48
      %p51 = scmp.ne.s32.totalorder %s34, %s50
      %p52 = scmp.eq.s32.totalorder %s26, 0
      %p53 = por %p51, %p52
      %s55 = sadd.s32 %s54, 1
      %p58 = scmp.eq.s32.totalorder %s20, 2
      %p59 = scmp.ne.s32.totalorder %s54, %s56
      %p60 = scmp.eq.s32.totalorder %s20, 0
      %p61 = por %p59, %p60
      %p62 = scmp.ne.s32.totalorder %s54, %s56
      %p63 = scmp.eq.s32.totalorder %s25, 2
      %p64 = por %p62, %p63
      %p65 = scmp.ne.s32.totalorder %s56, %s57
      %p66 = scmp.eq.s32.totalorder %s25, 0
      %p67 = por %p65, %p66
      %p68 = scmp.ne.s32.totalorder %s56, %s57
      %p69 = scmp.eq.s32.totalorder %s26, 2
      %p70 = por %p68, %p69
      %p72 = scmp.ne.s32.totalorder %s57, %s71
      %p73 = scmp.eq.s32.totalorder %s26, 0
      %p74 = por %p72, %p73
      %s76 = sadd.s32 %s75, 1
      %p79 = scmp.eq.s32.totalorder %s20, 2
      %p80 = scmp.ne.s32.totalorder %s75, %s77
      %p81 = scmp.eq.s32.totalorder %s20, 0
      %p82 = por %p80, %p81
      %p83 = scmp.ne.s32.totalorder %s75, %s77
      %p84 = scmp.eq.s32.totalorder %s25, 2
      %p85 = por %p83, %p84
      %p86 = scmp.ne.s32.totalorder %s77, %s78
      %p87 = scmp.eq.s32.totalorder %s25, 0
      %p88 = por %p86, %p87
      %p89 = scmp.ne.s32.totalorder %s77, %s78
      %p90 = scmp.eq.s32.totalorder %s26, 2
      %p91 = por %p89, %p90
      %p93 = scmp.ne.s32.totalorder %s78, %s92
      %p94 = scmp.eq.s32.totalorder %s26, 0
      %p95 = por %p93, %p94
      %s97 = sadd.s32 %s96, 1
      %p100 = scmp.eq.s32.totalorder %s20, 2
      %p101 = scmp.ne.s32.totalorder %s96, %s98
      %p102 = scmp.eq.s32.totalorder %s20, 0
      %p103 = por %p101, %p102
      %p104 = scmp.ne.s32.totalorder %s96, %s98
      %p105 = scmp.eq.s32.totalorder %s25, 2
      %p106 = por %p104, %p105
      %p107 = scmp.ne.s32.totalorder %s98, %s99
      %p108 = scmp.eq.s32.totalorder %s25, 0
      %p109 = por %p107, %p108
      %p110 = scmp.ne.s32.totalorder %s98, %s99
      %p111 = scmp.eq.s32.totalorder %s26, 2
      %p112 = por %p110, %p111
      %p114 = scmp.ne.s32.totalorder %s99, %s113
      %p115 = scmp.eq.s32.totalorder %s26, 0
      %p116 = por %p114, %p115
      %s118 = sadd.s32 %s117, 1
      %p121 = scmp.eq.s32.totalorder %s20, 2
      %p122 = scmp.ne.s32.totalorder %s117, %s119
      %p123 = scmp.eq.s32.totalorder %s20, 0
      %p124 = por %p122, %p123
      %p125 = scmp.ne.s32.totalorder %s117, %s119
      %p126 = scmp.eq.s32.totalorder %s25, 2
      %p127 = por %p125, %p126
      %p128 = scmp.ne.s32.totalorder %s119, %s120
      %p129 = scmp.eq.s32.totalorder %s25, 0
      %p130 = por %p128, %p129
      %p131 = scmp.ne.s32.totalorder %s119, %s120
      %p132 = scmp.eq.s32.totalorder %s26, 2
      %p133 = por %p131, %p132
      %p135 = scmp.ne.s32.totalorder %s120, %s134
      %p136 = scmp.eq.s32.totalorder %s26, 0
      %p137 = por %p135, %p136
      %s139 = sadd.s32 %s138, 1
      %p142 = scmp.eq.s32.totalorder %s20, 2
      %p143 = scmp.ne.s32.totalorder %s138, %s140
      %p144 = scmp.eq.s32.totalorder %s20, 0
      %p145 = por %p143, %p144
      %p146 = scmp.ne.s32.totalorder %s138, %s140
      %p147 = scmp.eq.s32.totalorder %s25, 2
      %p148 = por %p146, %p147
      %p149 = scmp.ne.s32.totalorder %s140, %s141
      %p150 = scmp.eq.s32.totalorder %s25, 0
      %p151 = por %p149, %p150
      %p152 = scmp.ne.s32.totalorder %s140, %s141
      %p153 = scmp.eq.s32.totalorder %s26, 2
      %p154 = por %p152, %p153
      %p156 = scmp.ne.s32.totalorder %s141, %s155
      %p157 = scmp.eq.s32.totalorder %s26, 0
      %p158 = por %p156, %p157
      %s160 = sadd.s32 %s159, 1
      %p163 = scmp.eq.s32.totalorder %s20, 2
      %p164 = scmp.ne.s32.totalorder %s159, %s161
      %p165 = scmp.eq.s32.totalorder %s20, 0
      %p166 = por %p164, %p165
      %p167 = scmp.ne.s32.totalorder %s159, %s161
      %p168 = scmp.eq.s32.totalorder %s25, 2
      %p169 = por %p167, %p168
      %p170 = scmp.ne.s32.totalorder %s161, %s162
      %p171 = scmp.eq.s32.totalorder %s25, 0
      %p172 = por %p170, %p171
      %p173 = scmp.ne.s32.totalorder %s161, %s162
      %p174 = scmp.eq.s32.totalorder %s26, 2
      %p175 = por %p173, %p174
      %p177 = scmp.ne.s32.totalorder %s162, %s176
      %p178 = scmp.eq.s32.totalorder %s26, 0
      %p179 = por %p177, %p178
      %s181 = sadd.s32 %s180, 1
      %p184 = scmp.eq.s32.totalorder %s20, 2
      %p185 = scmp.ne.s32.totalorder %s180, %s182
      %p186 = scmp.eq.s32.totalorder %s20, 0
      %p187 = por %p185, %p186
      %p188 = scmp.ne.s32.totalorder %s180, %s182
      %p189 = scmp.eq.s32.totalorder %s25, 2
      %p190 = por %p188, %p189
      %p191 = scmp.ne.s32.totalorder %s182, %s183
      %p192 = scmp.eq.s32.totalorder %s25, 0
      %p193 = por %p191, %p192
      %p194 = scmp.ne.s32.totalorder %s182, %s183
      %p195 = scmp.eq.s32.totalorder %s26, 2
      %p196 = por %p194, %p195
      %p198 = scmp.ne.s32.totalorder %s183, %s197
      %p199 = scmp.eq.s32.totalorder %s26, 0
      %p200 = por %p198, %p199
      %s202 = sadd.s32 %s201, 1
      %p205 = scmp.eq.s32.totalorder %s20, 2
      %p206 = scmp.ne.s32.totalorder %s201, %s203
      %p207 = scmp.eq.s32.totalorder %s20, 0
      %p208 = por %p206, %p207
      %p209 = scmp.ne.s32.totalorder %s201, %s203
      %p210 = scmp.eq.s32.totalorder %s25, 2
      %p211 = por %p209, %p210
      %p212 = scmp.ne.s32.totalorder %s203, %s204
      %p213 = scmp.eq.s32.totalorder %s25, 0
      %p214 = por %p212, %p213
      %p215 = scmp.ne.s32.totalorder %s203, %s204
      %p216 = scmp.eq.s32.totalorder %s26, 2
      %p217 = por %p215, %p216
      %p219 = scmp.ne.s32.totalorder %s204, %s218
      %p220 = scmp.eq.s32.totalorder %s26, 0
      %p221 = por %p219, %p220
      %s222 = ssub.s32 %s20, %s27
      %p223 = scmp.eq.s32.totalorder %s222, 0
      %s225 = sadd.s32 %s224, 1
      %s226 = scalar_select %p223, %s224, %s225
      %p229 = pneg %p223
      %p230 = scmp.eq.s32.totalorder %s20, 2
      %p231 = por %p229, %p230
      %p232 = scmp.ne.s32.totalorder %s224, %s227
      %p233 = scmp.eq.s32.totalorder %s20, 0
      %p234 = por %p232, %p233
      %p235 = scmp.ne.s32.totalorder %s224, %s227
      %p236 = scmp.eq.s32.totalorder %s25, 2
      %p237 = por %p235, %p236
      %p238 = scmp.ne.s32.totalorder %s227, %s228
      %p239 = scmp.eq.s32.totalorder %s25, 0
      %p240 = por %p238, %p239
      %p241 = scmp.ne.s32.totalorder %s227, %s228
      %p242 = scmp.eq.s32.totalorder %s26, 2
      %p243 = por %p241, %p242
      %p245 = scmp.ne.s32.totalorder %s228, %s244
      %p246 = scmp.eq.s32.totalorder %s26, 0
      %p247 = por %p245, %p246
      %p248 = scmp.le.s32.totalorder 1, %s20
      %p249 = scmp.lt.s32.totalorder %s20, 4
      %p250 = pnand %p248, %p249
      %p251 = pneg %p250
      // Predicated region
      $region9: #{tpu_custom_call.1} parent=5 // pred_check
        _
      $region10: #{tpu_custom_call.1} parent=5 // pred_check_branch
        %253 = sbr.rel (%p250) target = $region12
      $region11: #{tpu_custom_call.1} parent=5 // pred_region
        %s254 = ssub.s32 %s20, 1
        // Predicated region
        $region13: #{tpu_custom_call.1} parent=11 // pred_check
          %p255 = pneg %p67
        $region14: #{tpu_custom_call.1} parent=11 // pred_check_branch
          %257 = sbr.rel (%p255) target = $region16
        $region15: #{tpu_custom_call.1} parent=11 // pred_region
          _
        $region16: #{tpu_custom_call.1} parent=11 // pred_fallthru
          _
        // Predicated region
        $region17: #{tpu_custom_call.1} parent=11 // pred_check
          %p258 = pneg %p88
        $region18: #{tpu_custom_call.1} parent=11 // pred_check_branch
          %260 = sbr.rel (%p258) target = $region20
        $region19: #{tpu_custom_call.1} parent=11 // pred_region
          _
        $region20: #{tpu_custom_call.1} parent=11 // pred_fallthru
          _
        // Predicated region
        $region21: #{tpu_custom_call.1} parent=11 // pred_check
          %p261 = pneg %p109
        $region22: #{tpu_custom_call.1} parent=11 // pred_check_branch
          %263 = sbr.rel (%p261) target = $region24
        $region23: #{tpu_custom_call.1} parent=11 // pred_region
          _
        $region24: #{tpu_custom_call.1} parent=11 // pred_fallthru
          _
        // Predicated region
        $region25: #{tpu_custom_call.1} parent=11 // pred_check
          %p264 = pneg %p130
        $region26: #{tpu_custom_call.1} parent=11 // pred_check_branch
          %266 = sbr.rel (%p264) target = $region28
        $region27: #{tpu_custom_call.1} parent=11 // pred_region
          _
        $region28: #{tpu_custom_call.1} parent=11 // pred_fallthru
          _
        // Predicated region
        $region29: #{tpu_custom_call.1} parent=11 // pred_check
          %p267 = pneg %p151
        $region30: #{tpu_custom_call.1} parent=11 // pred_check_branch
          %269 = sbr.rel (%p267) target = $region32
        $region31: #{tpu_custom_call.1} parent=11 // pred_region
          _
        $region32: #{tpu_custom_call.1} parent=11 // pred_fallthru
          _
        // Predicated region
        $region33: #{tpu_custom_call.1} parent=11 // pred_check
          %p270 = pneg %p172
        $region34: #{tpu_custom_call.1} parent=11 // pred_check_branch
          %272 = sbr.rel (%p270) target = $region36
        $region35: #{tpu_custom_call.1} parent=11 // pred_region
          _
        $region36: #{tpu_custom_call.1} parent=11 // pred_fallthru
          _
        // Predicated region
        $region37: #{tpu_custom_call.1} parent=11 // pred_check
          %p273 = pneg %p193
        $region38: #{tpu_custom_call.1} parent=11 // pred_check_branch
          %275 = sbr.rel (%p273) target = $region40
        $region39: #{tpu_custom_call.1} parent=11 // pred_region
          _
        $region40: #{tpu_custom_call.1} parent=11 // pred_fallthru
          _
        // Predicated region
        $region41: #{tpu_custom_call.1} parent=11 // pred_check
          %p276 = pneg %p214
        $region42: #{tpu_custom_call.1} parent=11 // pred_check_branch
          %278 = sbr.rel (%p276) target = $region44
        $region43: #{tpu_custom_call.1} parent=11 // pred_region
          _
        $region44: #{tpu_custom_call.1} parent=11 // pred_fallthru
          _
      $region12: #{tpu_custom_call.1} parent=5 // pred_fallthru
        _
      %p279 = scmp.lt.s32.totalorder %s20, 3
      // Predicated region
      $region45: #{tpu_custom_call.1} parent=5 // pred_check
        %p280 = pneg %p279
      $region46: #{tpu_custom_call.1} parent=5 // pred_check_branch
        %282 = sbr.rel (%p280) target = $region48
      $region47: #{tpu_custom_call.1} parent=5 // pred_region
        // Predicated region
        $region49: #{tpu_custom_call.1} parent=47 // pred_check
          %p283 = pneg %p40
        $region50: #{tpu_custom_call.1} parent=47 // pred_check_branch
          %285 = sbr.rel (%p283) target = $region52
        $region51: #{tpu_custom_call.1} parent=47 // pred_region
          %p286 = scmp.lt.s32.totalorder %s20, 2
          %s287 = scalar_select %p286, %s20, 2
          %s288 = smul.addr %s287, 2
          %s289 = scalar_lea.vmem %s0, %s288
        $region52: #{tpu_custom_call.1} parent=47 // pred_fallthru
          _
      $region48: #{tpu_custom_call.1} parent=5 // pred_fallthru
        _
      %p290 = scmp.le.s32.totalorder 1, %s20
      %p291 = scmp.lt.s32.totalorder %s20, 4
      %p292 = pnand %p290, %p291
      %p293 = pneg %p292
      // Predicated region
      $region53: #{tpu_custom_call.1} parent=5 // pred_check
        _
      $region54: #{tpu_custom_call.1} parent=5 // pred_check_branch
        %295 = sbr.rel (%p292) target = $region56
      $region55: #{tpu_custom_call.1} parent=5 // pred_region
        %s296 = ssub.s32 %s20, 1
        %p297 = scmp.lt.s32.totalorder %s25, 2
        %s298 = scalar_select %p297, %s25, 2
        %s299 = smul.addr %s298, 2
        %s300 = scalar_lea.vmem %s0, %s299
        %p301 = pneg %p46
        %p302 = pneg %p43
        %p303 = pneg %p67
        %p304 = pneg %p64
        %p305 = pneg %p88
        %p306 = pneg %p85
        %p307 = pneg %p109
        %p308 = pneg %p106
        %p309 = pneg %p130
        %p310 = pneg %p127
        %p311 = pneg %p151
        %p312 = pneg %p148
        %p313 = pneg %p172
        %p314 = pneg %p169
        %p315 = pneg %p193
        %p316 = pneg %p190
        %p317 = pneg %p214
        %p318 = pneg %p211
        %p319 = pneg %p240
        %p320 = pneg %p237
        %s321 = sand.u32 %s227, 1
        %s322 = scalar_lea.sflag [#allocation4], %s321
        %s323 = sand.u32 %s227, 1
        %s324 = scalar_lea.vmem [#allocation3], %s323
        %p325 = scmp.lt.s32.totalorder %s25, 2
        %s326 = scalar_select %p325, %s25, 2
        %s327 = smul.addr %s326, 2
        %s328 = scalar_lea.vmem %s0, %s327
        %v329 = vld [vmem:[%s328] sm:$0x3]
        %v330 = vld [vmem:[%s1] sm:$0xff]
        %v331 = vld [vmem:[%s1 + $0x8] sm:$0xff]
        %v332 = vld [vmem:[%s1 + $0x10] sm:$0xff]
        %v333 = vld [vmem:[%s1 + $0x18] sm:$0xff]
        %v334 = vld [vmem:[%s2] sm:$0xff]
        %v335 = vld [vmem:[%s2 + $0x8] sm:$0xff]
        %v336 = vld [vmem:[%s2 + $0x10] sm:$0xff]
        %v337 = vld [vmem:[%s2 + $0x18] sm:$0xff]
        %339 = vset.pattern.permute.xlu0 0
        %340 = vperm.xlu0 %339, %v334
        %v341 = vpop.permute.xlu0 %340
        %344 = vset.pattern.permute.xlu0 0
        %345 = vperm.xlu0 %344, %v335
        %v346 = vpop.permute.xlu0 %345
        %349 = vset.pattern.permute.xlu0 0
        %350 = vperm.xlu0 %349, %v336
        %v351 = vpop.permute.xlu0 %350
        %354 = vset.pattern.permute.xlu0 0
        %355 = vperm.xlu0 %354, %v337
        %v356 = vpop.permute.xlu0 %355
        %vm358 = vcmask 15360
        %v360 = vsel %vm358, %v330, 0
        %v363 = vsel %vm358, %v331, 0
        %v366 = vsel %vm358, %v332, 0
        %v369 = vsel %vm358, %v333, 0
        %vm371 = vcmask 1041408
        %v373 = vsel %vm371, %v329, 0
        %375 = vmatprep.subr.mxu0 0.0
        %376 = vmatpush1.msra.mxu0 %v373
        %377 = vmatprep.subr.mxu0 0.0
        %378 = vmatpush1.msra.mxu0 0.0
        %379 = vmatprep.subr.mxu0 0.0
        %380 = vmatpush1.msra.mxu0 0.0
        %381 = vmatprep.subr.mxu0 0.0
        %382 = vmatpush1.msra.mxu0 0.0
        %383 = vmatprep.subr.mxu0 0.0
        %384 = vmatpush1.msra.mxu0 0.0
        %385 = vmatprep.subr.mxu0 0.0
        %386 = vmatpush1.msra.mxu0 0.0
        %387 = vmatprep.subr.mxu0 0.0
        %388 = vmatpush1.msra.mxu0 0.0
        %389 = vmatprep.subr.mxu0 0.0
        %390 = vmatpush1.msra.mxu0 0.0
        %391 = vmatprep.subr.mxu0 0.0
        %392 = vmatpush1.msra.mxu0 0.0
        %393 = vmatprep.subr.mxu0 0.0
        %394 = vmatpush1.msra.mxu0 0.0
        %395 = vmatprep.subr.mxu0 0.0
        %396 = vmatpush1.msra.mxu0 0.0
        %397 = vmatprep.subr.mxu0 0.0
        %398 = vmatpush1.msra.mxu0 0.0
        %399 = vmatprep.subr.mxu0 0.0
        %400 = vmatpush1.msra.mxu0 0.0
        %401 = vmatprep.subr.mxu0 0.0
        %402 = vmatpush1.msra.mxu0 0.0
        %403 = vmatprep.subr.mxu0 0.0
        %404 = vmatpush1.msra.mxu0 0.0
        %405 = vmatprep.subr.mxu0 0.0
        %406 = vmatpush1.msra.mxu0 0.0
        %407 = vmatprep.subr.mxu0 0.0
        %408 = vmatpush1.msra.mxu0 0.0
        %409 = vmatprep.subr.mxu0 0.0
        %410 = vmatpush1.msra.mxu0 0.0
        %411 = vmatprep.subr.mxu0 0.0
        %412 = vmatpush1.msra.mxu0 0.0
        %413 = vmatprep.subr.mxu0 0.0
        %414 = vmatpush1.msra.mxu0 0.0
        %415 = vmatprep.subr.mxu0 0.0
        %416 = vmatpush1.msra.mxu0 0.0
        %417 = vmatprep.subr.mxu0 0.0
        %418 = vmatpush1.msra.mxu0 0.0
        %419 = vmatprep.subr.mxu0 0.0
        %420 = vmatpush1.msra.mxu0 0.0
        %421 = vmatprep.subr.mxu0 0.0
        %422 = vmatpush1.msra.mxu0 0.0
        %423 = vmatprep.subr.mxu0 0.0
        %424 = vmatpush1.msra.mxu0 0.0
        %425 = vmatprep.subr.mxu0 0.0
        %426 = vmatpush1.msra.mxu0 0.0
        %427 = vmatprep.subr.mxu0 0.0
        %428 = vmatpush1.msra.mxu0 0.0
        %429 = vmatprep.subr.mxu0 0.0
        %430 = vmatpush1.msra.mxu0 0.0
        %431 = vmatprep.subr.mxu0 0.0
        %432 = vmatpush1.msra.mxu0 0.0
        %433 = vmatprep.subr.mxu0 0.0
        %434 = vmatpush1.msra.mxu0 0.0
        %435 = vmatprep.subr.mxu0 0.0
        %436 = vmatpush1.msra.mxu0 0.0
        %437 = vmatprep.subr.mxu0 0.0
        %438 = vmatpush1.msra.mxu0 0.0
        %439 = vmatprep.mubr.f32.mxu0 0.0
        %440 = vmatmul.mubr.f32.gmra.mrb[0].mxu0 %v360
        %v441 = vpop.f32.mrb[0].mxu0
        %v442 = vadd.f32 %v341, %v441
        %v443 = vpop.f32.mrb[0].mxu0
        %444 = vmatprep.mubr.f32.mxu0 0.0
        %445 = vmatmul.mubr.f32.gmra.mrb[0].mxu0 %v363
        %v446 = vpop.f32.mrb[0].mxu0
        %v447 = vadd.f32 %v346, %v446
        %v448 = vpop.f32.mrb[0].mxu0
        %449 = vmatprep.mubr.f32.mxu0 0.0
        %450 = vmatmul.mubr.f32.gmra.mrb[0].mxu0 %v366
        %v451 = vpop.f32.mrb[0].mxu0
        %v452 = vadd.f32 %v351, %v451
        %v453 = vpop.f32.mrb[0].mxu0
        %454 = vmatprep.mubr.f32.mxu0 0.0
        %455 = vmatmul.mubr.f32.gmra.mrb[0].mxu0 %v369
        %v456 = vpop.f32.mrb[0].mxu0
        %v457 = vadd.f32 %v356, %v456
        %v458 = vpop.f32.mrb[0].mxu0
        %459 = vdwg.mxu0
        %v460 = vand.u32 2147483647, %v442
        %vm461 = vcmp.le.f32.partialorder %v460, 0.7853982
        %vm462 = vcmp.lt.s32.totalorder %v442, 0
        %v463 = vand.u32 %v442, 2139095040
        %v464 = vshrl.u32 %v463, 23
        %v465 = vsub.s32 %v464, 127
        %v466 = vand.u32 2147483647, %v442
        %v467 = vand.u32 %v466, 8388607
        %v468 = vor.u32 %v467, 8388608
        %v469 = vsub.s32 0, %v468
        %v470 = vadd.s32 %v465, 1
        %vm471 = vcmp.gt.s32.totalorder %v470, 0
        %v472 = vsel %vm471, %v470, 0
        %v473 = vshrl.u32 %v472, 5
        %v474 = vand.u32 %v472, 31
        %v475 = vsub.s32 32, %v474
        %v476 = vshrl.u32 683565275, %v475
        %v477 = vshll.u32 683565275, %v474
        %v478 = vshrl.u32 2475754826, %v475
        %v479 = vor.u32 %v477, %v478
        %v480 = vshll.u32 2475754826, %v474
        %v481 = vshrl.u32 2131351028, %v475
        %v482 = vor.u32 %v480, %v481
        %v483 = vshll.u32 2131351028, %v474
        %v484 = vshrl.u32 2102212464, %v475
        %v485 = vor.u32 %v483, %v484
        %v486 = vshll.u32 2102212464, %v474
        %v487 = vshrl.u32 920167782, %v475
        %v488 = vor.u32 %v486, %v487
        %v489 = vshll.u32 920167782, %v474
        %v490 = vshrl.u32 1326507024, %v475
        %v491 = vor.u32 %v489, %v490
        %vm492 = vcmp.lt.s32.totalorder %v473, 1
        %vm493 = vcmp.lt.s32.totalorder %v473, 2
        %vm494 = vcmp.lt.s32.totalorder %v473, 3
        %vm495 = vcmp.lt.s32.totalorder %v473, 4
        %v496 = vsel %vm492, %v476, %v479
        %v497 = vsel %vm495, %v485, 2102212464
        %v498 = vsel %vm494, %v482, %v497
        %v499 = vsel %vm493, %v496, %v498
        %v500 = vsel %vm492, %v479, %v482
        %v501 = vsel %vm495, %v488, 920167782
        %v502 = vsel %vm494, %v485, %v501
        %v503 = vsel %vm493, %v500, %v502
        %v504 = vsel %vm492, %v482, %v485
        %v505 = vsel %vm495, %v491, 1326507024
        %v506 = vsel %vm494, %v488, %v505
        %v507 = vsel %vm493, %v504, %v506
        %v508 = vshll.u32 %v468, 8
        %v509 = vmul.u32.u64.compose %v508, %v507
        %v510 = vextract.low.u32 %v509
        %v511 = vextract.high.u32 %v509
        %v512 = vmul.u32.u64.compose %v508, %v503
        %v513 = vextract.low.u32 %v512
        %v514 = vextract.high.u32 %v512
        %v515 = vmul.u32 %v508, %v499
        %v516 = vadd.s32 %v511, %v513
        %vm517 = vc.u32 %v511, %v513
        %v518 = vadd.s32 %v514, 1
        %v519 = vsel %vm517, %v518, %v514
        %v520 = vadd.s32 %v515, %v519
        %v521 = vadd.s32 %v520, 536870912
        %v522 = vshrl.u32 %v521, 30
        %v523 = vshll.u32 %v522, 30
        %v524 = vsub.s32 %v520, %v523
        %vm525 = vcmp.lt.s32.totalorder %v524, 0
        %v526 = vsub.s32 0, %v524
        %v527 = vsel %vm525, %v526, %v524
        %v528 = vclz %v527
        %v529 = vsub.s32 %v528, 2
        %vm530 = vcmp.gt.s32.totalorder 0, %v529
        %v531 = vsel %vm530, 0, %v529
        %v532 = vsub.s32 32, %v531
        %v533 = vshll.u32 %v524, %v531
        %v534 = vshrl.u32 %v516, %v532
        %v535 = vor.u32 %v533, %v534
        %v536 = vsub.s32 4294967266, %v531
        %v537 = vadd.s32 %v536, 127
        %v538 = vshll.u32 %v537, 23
        %v539 = vor.u32 4788187, %v538
        %v540 = vand.u32 2147483647, %v539
        %v542 = vcvt.s32.f32 %v535
        %v543 = vmul.f32 %v542, %v540
        %v544 = vxor.u32 %v543, 2147483648
        %v545 = vsel %vm462, %v544, %v543
        %v546 = vsub.s32 4, %v522
        %v547 = vsel %vm462, %v546, %v522
        %v548 = vsel %vm461, %v442, %v545
        %v549 = vsel %vm461, 0, %v547
        %v550 = vcosq.f32.pop %v548
        %v551 = vsinq.f32.pop %v548
        %vm552 = vweird.f32 %v442
        %v553 = vadd.s32 %v549, 3
        %v554 = vand.u32 %v553, 3
        %vm555 = vcmp.lt.s32.totalorder %v554, 2
        %vm556 = vcmp.eq.s32.totalorder %v554, 0
        %v557 = vxor.u32 %v551, 2147483648
        %v558 = vsel %vm556, %v550, %v557
        %vm559 = vcmp.eq.s32.totalorder %v554, 2
        %v560 = vxor.u32 %v550, 2147483648
        %v561 = vsel %vm559, %v560, %v551
        %v562 = vsel %vm555, %v558, %v561
        %v563 = vsel %vm552, nan, %v562
        %v564 = vand.u32 2147483647, %v447
        %vm565 = vcmp.le.f32.partialorder %v564, 0.7853982
        %vm566 = vcmp.lt.s32.totalorder %v447, 0
        %v567 = vand.u32 %v447, 2139095040
        %v568 = vshrl.u32 %v567, 23
        %v569 = vsub.s32 %v568, 127
        %v570 = vand.u32 2147483647, %v447
        %v571 = vand.u32 %v570, 8388607
        %v572 = vor.u32 %v571, 8388608
        %v573 = vsub.s32 0, %v572
        %v574 = vadd.s32 %v569, 1
        %vm575 = vcmp.gt.s32.totalorder %v574, 0
        %v576 = vsel %vm575, %v574, 0
        %v577 = vshrl.u32 %v576, 5
        %v578 = vand.u32 %v576, 31
        %v579 = vsub.s32 32, %v578
        %v580 = vshrl.u32 683565275, %v579
        %v581 = vshll.u32 683565275, %v578
        %v582 = vshrl.u32 2475754826, %v579
        %v583 = vor.u32 %v581, %v582
        %v584 = vshll.u32 2475754826, %v578
        %v585 = vshrl.u32 2131351028, %v579
        %v586 = vor.u32 %v584, %v585
        %v587 = vshll.u32 2131351028, %v578
        %v588 = vshrl.u32 2102212464, %v579
        %v589 = vor.u32 %v587, %v588
        %v590 = vshll.u32 2102212464, %v578
        %v591 = vshrl.u32 920167782, %v579
        %v592 = vor.u32 %v590, %v591
        %v593 = vshll.u32 920167782, %v578
        %v594 = vshrl.u32 1326507024, %v579
        %v595 = vor.u32 %v593, %v594
        %vm596 = vcmp.lt.s32.totalorder %v577, 1
        %vm597 = vcmp.lt.s32.totalorder %v577, 2
        %vm598 = vcmp.lt.s32.totalorder %v577, 3
        %vm599 = vcmp.lt.s32.totalorder %v577, 4
        %v600 = vsel %vm596, %v580, %v583
        %v601 = vsel %vm599, %v589, 2102212464
        %v602 = vsel %vm598, %v586, %v601
        %v603 = vsel %vm597, %v600, %v602
        %v604 = vsel %vm596, %v583, %v586
        %v605 = vsel %vm599, %v592, 920167782
        %v606 = vsel %vm598, %v589, %v605
        %v607 = vsel %vm597, %v604, %v606
        %v608 = vsel %vm596, %v586, %v589
        %v609 = vsel %vm599, %v595, 1326507024
        %v610 = vsel %vm598, %v592, %v609
        %v611 = vsel %vm597, %v608, %v610
        %v612 = vshll.u32 %v572, 8
        %v613 = vmul.u32.u64.compose %v612, %v611
        %v614 = vextract.low.u32 %v613
        %v615 = vextract.high.u32 %v613
        %v616 = vmul.u32.u64.compose %v612, %v607
        %v617 = vextract.low.u32 %v616
        %v618 = vextract.high.u32 %v616
        %v619 = vmul.u32 %v612, %v603
        %v620 = vadd.s32 %v615, %v617
        %vm621 = vc.u32 %v615, %v617
        %v622 = vadd.s32 %v618, 1
        %v623 = vsel %vm621, %v622, %v618
        %v624 = vadd.s32 %v619, %v623
        %v625 = vadd.s32 %v624, 536870912
        %v626 = vshrl.u32 %v625, 30
        %v627 = vshll.u32 %v626, 30
        %v628 = vsub.s32 %v624, %v627
        %vm629 = vcmp.lt.s32.totalorder %v628, 0
        %v630 = vsub.s32 0, %v628
        %v631 = vsel %vm629, %v630, %v628
        %v632 = vclz %v631
        %v633 = vsub.s32 %v632, 2
        %vm634 = vcmp.gt.s32.totalorder 0, %v633
        %v635 = vsel %vm634, 0, %v633
        %v636 = vsub.s32 32, %v635
        %v637 = vshll.u32 %v628, %v635
        %v638 = vshrl.u32 %v620, %v636
        %v639 = vor.u32 %v637, %v638
        %v640 = vsub.s32 4294967266, %v635
        %v641 = vadd.s32 %v640, 127
        %v642 = vshll.u32 %v641, 23
        %v643 = vor.u32 4788187, %v642
        %v644 = vand.u32 2147483647, %v643
        %v646 = vcvt.s32.f32 %v639
        %v647 = vmul.f32 %v646, %v644
        %v648 = vxor.u32 %v647, 2147483648
        %v649 = vsel %vm566, %v648, %v647
        %v650 = vsub.s32 4, %v626
        %v651 = vsel %vm566, %v650, %v626
        %v652 = vsel %vm565, %v447, %v649
        %v653 = vsel %vm565, 0, %v651
        %v654 = vcosq.f32.pop %v652
        %v655 = vsinq.f32.pop %v652
        %vm656 = vweird.f32 %v447
        %v657 = vadd.s32 %v653, 3
        %v658 = vand.u32 %v657, 3
        %vm659 = vcmp.lt.s32.totalorder %v658, 2
        %vm660 = vcmp.eq.s32.totalorder %v658, 0
        %v661 = vxor.u32 %v655, 2147483648
        %v662 = vsel %vm660, %v654, %v661
        %vm663 = vcmp.eq.s32.totalorder %v658, 2
        %v664 = vxor.u32 %v654, 2147483648
        %v665 = vsel %vm663, %v664, %v655
        %v666 = vsel %vm659, %v662, %v665
        %v667 = vsel %vm656, nan, %v666
        %v668 = vand.u32 2147483647, %v452
        %vm669 = vcmp.le.f32.partialorder %v668, 0.7853982
        %vm670 = vcmp.lt.s32.totalorder %v452, 0
        %v671 = vand.u32 %v452, 2139095040
        %v672 = vshrl.u32 %v671, 23
        %v673 = vsub.s32 %v672, 127
        %v674 = vand.u32 2147483647, %v452
        %v675 = vand.u32 %v674, 8388607
        %v676 = vor.u32 %v675, 8388608
        %v677 = vsub.s32 0, %v676
        %v678 = vadd.s32 %v673, 1
        %vm679 = vcmp.gt.s32.totalorder %v678, 0
        %v680 = vsel %vm679, %v678, 0
        %v681 = vshrl.u32 %v680, 5
        %v682 = vand.u32 %v680, 31
        %v683 = vsub.s32 32, %v682
        %v684 = vshrl.u32 683565275, %v683
        %v685 = vshll.u32 683565275, %v682
        %v686 = vshrl.u32 2475754826, %v683
        %v687 = vor.u32 %v685, %v686
        %v688 = vshll.u32 2475754826, %v682
        %v689 = vshrl.u32 2131351028, %v683
        %v690 = vor.u32 %v688, %v689
        %v691 = vshll.u32 2131351028, %v682
        %v692 = vshrl.u32 2102212464, %v683
        %v693 = vor.u32 %v691, %v692
        %v694 = vshll.u32 2102212464, %v682
        %v695 = vshrl.u32 920167782, %v683
        %v696 = vor.u32 %v694, %v695
        %v697 = vshll.u32 920167782, %v682
        %v698 = vshrl.u32 1326507024, %v683
        %v699 = vor.u32 %v697, %v698
        %vm700 = vcmp.lt.s32.totalorder %v681, 1
        %vm701 = vcmp.lt.s32.totalorder %v681, 2
        %vm702 = vcmp.lt.s32.totalorder %v681, 3
        %vm703 = vcmp.lt.s32.totalorder %v681, 4
        %v704 = vsel %vm700, %v684, %v687
        %v705 = vsel %vm703, %v693, 2102212464
        %v706 = vsel %vm702, %v690, %v705
        %v707 = vsel %vm701, %v704, %v706
        %v708 = vsel %vm700, %v687, %v690
        %v709 = vsel %vm703, %v696, 920167782
        %v710 = vsel %vm702, %v693, %v709
        %v711 = vsel %vm701, %v708, %v710
        %v712 = vsel %vm700, %v690, %v693
        %v713 = vsel %vm703, %v699, 1326507024
        %v714 = vsel %vm702, %v696, %v713
        %v715 = vsel %vm701, %v712, %v714
        %v716 = vshll.u32 %v676, 8
        %v717 = vmul.u32.u64.compose %v716, %v715
        %v718 = vextract.low.u32 %v717
        %v719 = vextract.high.u32 %v717
        %v720 = vmul.u32.u64.compose %v716, %v711
        %v721 = vextract.low.u32 %v720
        %v722 = vextract.high.u32 %v720
        %v723 = vmul.u32 %v716, %v707
        %v724 = vadd.s32 %v719, %v721
        %vm725 = vc.u32 %v719, %v721
        %v726 = vadd.s32 %v722, 1
        %v727 = vsel %vm725, %v726, %v722
        %v728 = vadd.s32 %v723, %v727
        %v729 = vadd.s32 %v728, 536870912
        %v730 = vshrl.u32 %v729, 30
        %v731 = vshll.u32 %v730, 30
        %v732 = vsub.s32 %v728, %v731
        %vm733 = vcmp.lt.s32.totalorder %v732, 0
        %v734 = vsub.s32 0, %v732
        %v735 = vsel %vm733, %v734, %v732
        %v736 = vclz %v735
        %v737 = vsub.s32 %v736, 2
        %vm738 = vcmp.gt.s32.totalorder 0, %v737
        %v739 = vsel %vm738, 0, %v737
        %v740 = vsub.s32 32, %v739
        %v741 = vshll.u32 %v732, %v739
        %v742 = vshrl.u32 %v724, %v740
        %v743 = vor.u32 %v741, %v742
        %v744 = vsub.s32 4294967266, %v739
        %v745 = vadd.s32 %v744, 127
        %v746 = vshll.u32 %v745, 23
        %v747 = vor.u32 4788187, %v746
        %v748 = vand.u32 2147483647, %v747
        %v750 = vcvt.s32.f32 %v743
        %v751 = vmul.f32 %v750, %v748
        %v752 = vxor.u32 %v751, 2147483648
        %v753 = vsel %vm670, %v752, %v751
        %v754 = vsub.s32 4, %v730
        %v755 = vsel %vm670, %v754, %v730
        %v756 = vsel %vm669, %v452, %v753
        %v757 = vsel %vm669, 0, %v755
        %v758 = vcosq.f32.pop %v756
        %v759 = vsinq.f32.pop %v756
        %vm760 = vweird.f32 %v452
        %v761 = vadd.s32 %v757, 3
        %v762 = vand.u32 %v761, 3
        %vm763 = vcmp.lt.s32.totalorder %v762, 2
        %vm764 = vcmp.eq.s32.totalorder %v762, 0
        %v765 = vxor.u32 %v759, 2147483648
        %v766 = vsel %vm764, %v758, %v765
        %vm767 = vcmp.eq.s32.totalorder %v762, 2
        %v768 = vxor.u32 %v758, 2147483648
        %v769 = vsel %vm767, %v768, %v759
        %v770 = vsel %vm763, %v766, %v769
        %v771 = vsel %vm760, nan, %v770
        %v772 = vand.u32 2147483647, %v457
        %vm773 = vcmp.le.f32.partialorder %v772, 0.7853982
        %vm774 = vcmp.lt.s32.totalorder %v457, 0
        %v775 = vand.u32 %v457, 2139095040
        %v776 = vshrl.u32 %v775, 23
        %v777 = vsub.s32 %v776, 127
        %v778 = vand.u32 2147483647, %v457
        %v779 = vand.u32 %v778, 8388607
        %v780 = vor.u32 %v779, 8388608
        %v781 = vsub.s32 0, %v780
        %v782 = vadd.s32 %v777, 1
        %vm783 = vcmp.gt.s32.totalorder %v782, 0
        %v784 = vsel %vm783, %v782, 0
        %v785 = vshrl.u32 %v784, 5
        %v786 = vand.u32 %v784, 31
        %v787 = vsub.s32 32, %v786
        %v788 = vshrl.u32 683565275, %v787
        %v789 = vshll.u32 683565275, %v786
        %v790 = vshrl.u32 2475754826, %v787
        %v791 = vor.u32 %v789, %v790
        %v792 = vshll.u32 2475754826, %v786
        %v793 = vshrl.u32 2131351028, %v787
        %v794 = vor.u32 %v792, %v793
        %v795 = vshll.u32 2131351028, %v786
        %v796 = vshrl.u32 2102212464, %v787
        %v797 = vor.u32 %v795, %v796
        %v798 = vshll.u32 2102212464, %v786
        %v799 = vshrl.u32 920167782, %v787
        %v800 = vor.u32 %v798, %v799
        %v801 = vshll.u32 920167782, %v786
        %v802 = vshrl.u32 1326507024, %v787
        %v803 = vor.u32 %v801, %v802
        %vm804 = vcmp.lt.s32.totalorder %v785, 1
        %vm805 = vcmp.lt.s32.totalorder %v785, 2
        %vm806 = vcmp.lt.s32.totalorder %v785, 3
        %vm807 = vcmp.lt.s32.totalorder %v785, 4
        %v808 = vsel %vm804, %v788, %v791
        %v809 = vsel %vm807, %v797, 2102212464
        %v810 = vsel %vm806, %v794, %v809
        %v811 = vsel %vm805, %v808, %v810
        %v812 = vsel %vm804, %v791, %v794
        %v813 = vsel %vm807, %v800, 920167782
        %v814 = vsel %vm806, %v797, %v813
        %v815 = vsel %vm805, %v812, %v814
        %v816 = vsel %vm804, %v794, %v797
        %v817 = vsel %vm807, %v803, 1326507024
        %v818 = vsel %vm806, %v800, %v817
        %v819 = vsel %vm805, %v816, %v818
        %v820 = vshll.u32 %v780, 8
        %v821 = vmul.u32.u64.compose %v820, %v819
        %v822 = vextract.low.u32 %v821
        %v823 = vextract.high.u32 %v821
        %v824 = vmul.u32.u64.compose %v820, %v815
        %v825 = vextract.low.u32 %v824
        %v826 = vextract.high.u32 %v824
        %v827 = vmul.u32 %v820, %v811
        %v828 = vadd.s32 %v823, %v825
        %vm829 = vc.u32 %v823, %v825
        %v830 = vadd.s32 %v826, 1
        %v831 = vsel %vm829, %v830, %v826
        %v832 = vadd.s32 %v827, %v831
        %v833 = vadd.s32 %v832, 536870912
        %v834 = vshrl.u32 %v833, 30
        %v835 = vshll.u32 %v834, 30
        %v836 = vsub.s32 %v832, %v835
        %vm837 = vcmp.lt.s32.totalorder %v836, 0
        %v838 = vsub.s32 0, %v836
        %v839 = vsel %vm837, %v838, %v836
        %v840 = vclz %v839
        %v841 = vsub.s32 %v840, 2
        %vm842 = vcmp.gt.s32.totalorder 0, %v841
        %v843 = vsel %vm842, 0, %v841
        %v844 = vsub.s32 32, %v843
        %v845 = vshll.u32 %v836, %v843
        %v846 = vshrl.u32 %v828, %v844
        %v847 = vor.u32 %v845, %v846
        %v848 = vsub.s32 4294967266, %v843
        %v849 = vadd.s32 %v848, 127
        %v850 = vshll.u32 %v849, 23
        %v851 = vor.u32 4788187, %v850
        %v852 = vand.u32 2147483647, %v851
        %v854 = vcvt.s32.f32 %v847
        %v855 = vmul.f32 %v854, %v852
        %v856 = vxor.u32 %v855, 2147483648
        %v857 = vsel %vm774, %v856, %v855
        %v858 = vsub.s32 4, %v834
        %v859 = vsel %vm774, %v858, %v834
        %v860 = vsel %vm773, %v457, %v857
        %v861 = vsel %vm773, 0, %v859
        %v862 = vcosq.f32.pop %v860
        %v863 = vsinq.f32.pop %v860
        %vm864 = vweird.f32 %v457
        %v865 = vadd.s32 %v861, 3
        %v866 = vand.u32 %v865, 3
        %vm867 = vcmp.lt.s32.totalorder %v866, 2
        %vm868 = vcmp.eq.s32.totalorder %v866, 0
        %v869 = vxor.u32 %v863, 2147483648
        %v870 = vsel %vm868, %v862, %v869
        %vm871 = vcmp.eq.s32.totalorder %v866, 2
        %v872 = vxor.u32 %v862, 2147483648
        %v873 = vsel %vm871, %v872, %v863
        %v874 = vsel %vm867, %v870, %v873
        %v875 = vsel %vm864, nan, %v874
        %v876 = vmul.f32 %v563, %v563
        %v877 = vmul.f32 %v667, %v667
        %v878 = vmul.f32 %v771, %v771
        %v879 = vmul.f32 %v875, %v875
        %v880 = vadd.f32 %v442, %v876
        %v881 = vadd.f32 %v447, %v877
        %v882 = vadd.f32 %v452, %v878
        %v883 = vadd.f32 %v457, %v879
        %v884 = vld [vmem:[%s3] sm:$0xff]
        %v885 = vld [vmem:[%s3 + $0x8] sm:$0xff]
        %v886 = vld [vmem:[%s3 + $0x10] sm:$0xff]
        %v887 = vld [vmem:[%s3 + $0x18] sm:$0xff]
        %v888 = vld [vmem:[%s4] sm:$0xff]
        %v889 = vld [vmem:[%s4 + $0x8] sm:$0xff]
        %v890 = vld [vmem:[%s4 + $0x10] sm:$0xff]
        %v891 = vld [vmem:[%s4 + $0x18] sm:$0xff]
        %893 = vset.pattern.permute.xlu0 0
        %894 = vperm.xlu0 %893, %v888
        %v895 = vpop.permute.xlu0 %894
        %898 = vset.pattern.permute.xlu0 0
        %899 = vperm.xlu0 %898, %v889
        %v900 = vpop.permute.xlu0 %899
        %903 = vset.pattern.permute.xlu0 0
        %904 = vperm.xlu0 %903, %v890
        %v905 = vpop.permute.xlu0 %904
        %908 = vset.pattern.permute.xlu0 0
        %909 = vperm.xlu0 %908, %v891
        %v910 = vpop.permute.xlu0 %909
        %vm912 = vcmask 261120
        %v914 = vsel %vm912, %v884, 0
        %v917 = vsel %vm912, %v885, 0
        %v920 = vsel %vm912, %v886, 0
        %v923 = vsel %vm912, %v887, 0
        %925 = vmatprep.subr.mxu0 0.0
        %926 = vmatpush1.msra.mxu0 %v880
        %927 = vmatprep.subr.mxu0 0.0
        %928 = vmatpush1.msra.mxu0 %v881
        %929 = vmatprep.subr.mxu0 0.0
        %930 = vmatpush1.msra.mxu0 %v882
        %931 = vmatprep.subr.mxu0 0.0
        %932 = vmatpush1.msra.mxu0 %v883
        %933 = vmatprep.subr.mxu0 0.0
        %934 = vmatpush1.msra.mxu0 0.0
        %935 = vmatprep.subr.mxu0 0.0
        %936 = vmatpush1.msra.mxu0 0.0
        %937 = vmatprep.subr.mxu0 0.0
        %938 = vmatpush1.msra.mxu0 0.0
        %939 = vmatprep.subr.mxu0 0.0
        %940 = vmatpush1.msra.mxu0 0.0
        %941 = vmatprep.subr.mxu0 0.0
        %942 = vmatpush1.msra.mxu0 0.0
        %943 = vmatprep.subr.mxu0 0.0
        %944 = vmatpush1.msra.mxu0 0.0
        %945 = vmatprep.subr.mxu0 0.0
        %946 = vmatpush1.msra.mxu0 0.0
        %947 = vmatprep.subr.mxu0 0.0
        %948 = vmatpush1.msra.mxu0 0.0
        %949 = vmatprep.subr.mxu0 0.0
        %950 = vmatpush1.msra.mxu0 0.0
        %951 = vmatprep.subr.mxu0 0.0
        %952 = vmatpush1.msra.mxu0 0.0
        %953 = vmatprep.subr.mxu0 0.0
        %954 = vmatpush1.msra.mxu0 0.0
        %955 = vmatprep.subr.mxu0 0.0
        %956 = vmatpush1.msra.mxu0 0.0
        %957 = vmatprep.subr.mxu0 0.0
        %958 = vmatpush1.msra.mxu0 0.0
        %959 = vmatprep.subr.mxu0 0.0
        %960 = vmatpush1.msra.mxu0 0.0
        %961 = vmatprep.subr.mxu0 0.0
        %962 = vmatpush1.msra.mxu0 0.0
        %963 = vmatprep.subr.mxu0 0.0
        %964 = vmatpush1.msra.mxu0 0.0
        %965 = vmatprep.subr.mxu0 0.0
        %966 = vmatpush1.msra.mxu0 0.0
        %967 = vmatprep.subr.mxu0 0.0
        %968 = vmatpush1.msra.mxu0 0.0
        %969 = vmatprep.subr.mxu0 0.0
        %970 = vmatpush1.msra.mxu0 0.0
        %971 = vmatprep.subr.mxu0 0.0
        %972 = vmatpush1.msra.mxu0 0.0
        %973 = vmatprep.subr.mxu0 0.0
        %974 = vmatpush1.msra.mxu0 0.0
        %975 = vmatprep.subr.mxu0 0.0
        %976 = vmatpush1.msra.mxu0 0.0
        %977 = vmatprep.subr.mxu0 0.0
        %978 = vmatpush1.msra.mxu0 0.0
        %979 = vmatprep.subr.mxu0 0.0
        %980 = vmatpush1.msra.mxu0 0.0
        %981 = vmatprep.subr.mxu0 0.0
        %982 = vmatpush1.msra.mxu0 0.0
        %983 = vmatprep.subr.mxu0 0.0
        %984 = vmatpush1.msra.mxu0 0.0
        %985 = vmatprep.subr.mxu0 0.0
        %986 = vmatpush1.msra.mxu0 0.0
        %987 = vmatprep.subr.mxu0 0.0
        %988 = vmatpush1.msra.mxu0 0.0
        %989 = vmatprep.mubr.f32.mxu0 0.0
        %990 = vmatmul.mubr.f32.gmra.mrb[0].mxu0 %v914
        %v991 = vpop.f32.mrb[0].mxu0
        %v992 = vadd.f32 %v895, %v991
        %v993 = vpop.f32.mrb[0].mxu0
        %994 = vmatprep.mubr.f32.mxu0 0.0
        %995 = vmatmul.mubr.f32.gmra.mrb[0].mxu0 %v917
        %v996 = vpop.f32.mrb[0].mxu0
        %v997 = vadd.f32 %v900, %v996
        %v998 = vpop.f32.mrb[0].mxu0
        %999 = vmatprep.mubr.f32.mxu0 0.0
        %1000 = vmatmul.mubr.f32.gmra.mrb[0].mxu0 %v920
        %v1001 = vpop.f32.mrb[0].mxu0
        %v1002 = vadd.f32 %v905, %v1001
        %v1003 = vpop.f32.mrb[0].mxu0
        %1004 = vmatprep.mubr.f32.mxu0 0.0
        %1005 = vmatmul.mubr.f32.gmra.mrb[0].mxu0 %v923
        %v1006 = vpop.f32.mrb[0].mxu0
        %v1007 = vadd.f32 %v910, %v1006
        %v1008 = vpop.f32.mrb[0].mxu0
        %1009 = vdwg.mxu0
        %v1010 = vand.u32 2147483647, %v992
        %vm1011 = vcmp.le.f32.partialorder %v1010, 0.7853982
        %vm1012 = vcmp.lt.s32.totalorder %v992, 0
        %v1013 = vand.u32 %v992, 2139095040
        %v1014 = vshrl.u32 %v1013, 23
        %v1015 = vsub.s32 %v1014, 127
        %v1016 = vand.u32 2147483647, %v992
        %v1017 = vand.u32 %v1016, 8388607
        %v1018 = vor.u32 %v1017, 8388608
        %v1019 = vsub.s32 0, %v1018
        %v1020 = vadd.s32 %v1015, 1
        %vm1021 = vcmp.gt.s32.totalorder %v1020, 0
        %v1022 = vsel %vm1021, %v1020, 0
        %v1023 = vshrl.u32 %v1022, 5
        %v1024 = vand.u32 %v1022, 31
        %v1025 = vsub.s32 32, %v1024
        %v1026 = vshrl.u32 683565275, %v1025
        %v1027 = vshll.u32 683565275, %v1024
        %v1028 = vshrl.u32 2475754826, %v1025
        %v1029 = vor.u32 %v1027, %v1028
        %v1030 = vshll.u32 2475754826, %v1024
        %v1031 = vshrl.u32 2131351028, %v1025
        %v1032 = vor.u32 %v1030, %v1031
        %v1033 = vshll.u32 2131351028, %v1024
        %v1034 = vshrl.u32 2102212464, %v1025
        %v1035 = vor.u32 %v1033, %v1034
        %v1036 = vshll.u32 2102212464, %v1024
        %v1037 = vshrl.u32 920167782, %v1025
        %v1038 = vor.u32 %v1036, %v1037
        %v1039 = vshll.u32 920167782, %v1024
        %v1040 = vshrl.u32 1326507024, %v1025
        %v1041 = vor.u32 %v1039, %v1040
        %vm1042 = vcmp.lt.s32.totalorder %v1023, 1
        %vm1043 = vcmp.lt.s32.totalorder %v1023, 2
        %vm1044 = vcmp.lt.s32.totalorder %v1023, 3
        %vm1045 = vcmp.lt.s32.totalorder %v1023, 4
        %v1046 = vsel %vm1042, %v1026, %v1029
        %v1047 = vsel %vm1045, %v1035, 2102212464
        %v1048 = vsel %vm1044, %v1032, %v1047
        %v1049 = vsel %vm1043, %v1046, %v1048
        %v1050 = vsel %vm1042, %v1029, %v1032
        %v1051 = vsel %vm1045, %v1038, 920167782
        %v1052 = vsel %vm1044, %v1035, %v1051
        %v1053 = vsel %vm1043, %v1050, %v1052
        %v1054 = vsel %vm1042, %v1032, %v1035
        %v1055 = vsel %vm1045, %v1041, 1326507024
        %v1056 = vsel %vm1044, %v1038, %v1055
        %v1057 = vsel %vm1043, %v1054, %v1056
        %v1058 = vshll.u32 %v1018, 8
        %v1059 = vmul.u32.u64.compose %v1058, %v1057
        %v1060 = vextract.low.u32 %v1059
        %v1061 = vextract.high.u32 %v1059
        %v1062 = vmul.u32.u64.compose %v1058, %v1053
        %v1063 = vextract.low.u32 %v1062
        %v1064 = vextract.high.u32 %v1062
        %v1065 = vmul.u32 %v1058, %v1049
        %v1066 = vadd.s32 %v1061, %v1063
        %vm1067 = vc.u32 %v1061, %v1063
        %v1068 = vadd.s32 %v1064, 1
        %v1069 = vsel %vm1067, %v1068, %v1064
        %v1070 = vadd.s32 %v1065, %v1069
        %v1071 = vadd.s32 %v1070, 536870912
        %v1072 = vshrl.u32 %v1071, 30
        %v1073 = vshll.u32 %v1072, 30
        %v1074 = vsub.s32 %v1070, %v1073
        %vm1075 = vcmp.lt.s32.totalorder %v1074, 0
        %v1076 = vsub.s32 0, %v1074
        %v1077 = vsel %vm1075, %v1076, %v1074
        %v1078 = vclz %v1077
        %v1079 = vsub.s32 %v1078, 2
        %vm1080 = vcmp.gt.s32.totalorder 0, %v1079
        %v1081 = vsel %vm1080, 0, %v1079
        %v1082 = vsub.s32 32, %v1081
        %v1083 = vshll.u32 %v1074, %v1081
        %v1084 = vshrl.u32 %v1066, %v1082
        %v1085 = vor.u32 %v1083, %v1084
        %v1086 = vsub.s32 4294967266, %v1081
        %v1087 = vadd.s32 %v1086, 127
        %v1088 = vshll.u32 %v1087, 23
        %v1089 = vor.u32 4788187, %v1088
        %v1090 = vand.u32 2147483647, %v1089
        %v1092 = vcvt.s32.f32 %v1085
        %v1093 = vmul.f32 %v1092, %v1090
        %v1094 = vxor.u32 %v1093, 2147483648
        %v1095 = vsel %vm1012, %v1094, %v1093
        %v1096 = vsub.s32 4, %v1072
        %v1097 = vsel %vm1012, %v1096, %v1072
        %v1098 = vsel %vm1011, %v992, %v1095
        %v1099 = vsel %vm1011, 0, %v1097
        %v1100 = vcosq.f32.pop %v1098
        %v1101 = vsinq.f32.pop %v1098
        %vm1102 = vweird.f32 %v992
        %v1103 = vadd.s32 %v1099, 3
        %v1104 = vand.u32 %v1103, 3
        %vm1105 = vcmp.lt.s32.totalorder %v1104, 2
        %vm1106 = vcmp.eq.s32.totalorder %v1104, 0
        %v1107 = vxor.u32 %v1101, 2147483648
        %v1108 = vsel %vm1106, %v1100, %v1107
        %vm1109 = vcmp.eq.s32.totalorder %v1104, 2
        %v1110 = vxor.u32 %v1100, 2147483648
        %v1111 = vsel %vm1109, %v1110, %v1101
        %v1112 = vsel %vm1105, %v1108, %v1111
        %v1113 = vsel %vm1102, nan, %v1112
        %v1114 = vand.u32 2147483647, %v997
        %vm1115 = vcmp.le.f32.partialorder %v1114, 0.7853982
        %vm1116 = vcmp.lt.s32.totalorder %v997, 0
        %v1117 = vand.u32 %v997, 2139095040
        %v1118 = vshrl.u32 %v1117, 23
        %v1119 = vsub.s32 %v1118, 127
        %v1120 = vand.u32 2147483647, %v997
        %v1121 = vand.u32 %v1120, 8388607
        %v1122 = vor.u32 %v1121, 8388608
        %v1123 = vsub.s32 0, %v1122
        %v1124 = vadd.s32 %v1119, 1
        %vm1125 = vcmp.gt.s32.totalorder %v1124, 0
        %v1126 = vsel %vm1125, %v1124, 0
        %v1127 = vshrl.u32 %v1126, 5
        %v1128 = vand.u32 %v1126, 31
        %v1129 = vsub.s32 32, %v1128
        %v1130 = vshrl.u32 683565275, %v1129
        %v1131 = vshll.u32 683565275, %v1128
        %v1132 = vshrl.u32 2475754826, %v1129
        %v1133 = vor.u32 %v1131, %v1132
        %v1134 = vshll.u32 2475754826, %v1128
        %v1135 = vshrl.u32 2131351028, %v1129
        %v1136 = vor.u32 %v1134, %v1135
        %v1137 = vshll.u32 2131351028, %v1128
        %v1138 = vshrl.u32 2102212464, %v1129
        %v1139 = vor.u32 %v1137, %v1138
        %v1140 = vshll.u32 2102212464, %v1128
        %v1141 = vshrl.u32 920167782, %v1129
        %v1142 = vor.u32 %v1140, %v1141
        %v1143 = vshll.u32 920167782, %v1128
        %v1144 = vshrl.u32 1326507024, %v1129
        %v1145 = vor.u32 %v1143, %v1144
        %vm1146 = vcmp.lt.s32.totalorder %v1127, 1
        %vm1147 = vcmp.lt.s32.totalorder %v1127, 2
        %vm1148 = vcmp.lt.s32.totalorder %v1127, 3
        %vm1149 = vcmp.lt.s32.totalorder %v1127, 4
        %v1150 = vsel %vm1146, %v1130, %v1133
        %v1151 = vsel %vm1149, %v1139, 2102212464
        %v1152 = vsel %vm1148, %v1136, %v1151
        %v1153 = vsel %vm1147, %v1150, %v1152
        %v1154 = vsel %vm1146, %v1133, %v1136
        %v1155 = vsel %vm1149, %v1142, 920167782
        %v1156 = vsel %vm1148, %v1139, %v1155
        %v1157 = vsel %vm1147, %v1154, %v1156
        %v1158 = vsel %vm1146, %v1136, %v1139
        %v1159 = vsel %vm1149, %v1145, 1326507024
        %v1160 = vsel %vm1148, %v1142, %v1159
        %v1161 = vsel %vm1147, %v1158, %v1160
        %v1162 = vshll.u32 %v1122, 8
        %v1163 = vmul.u32.u64.compose %v1162, %v1161
        %v1164 = vextract.low.u32 %v1163
        %v1165 = vextract.high.u32 %v1163
        %v1166 = vmul.u32.u64.compose %v1162, %v1157
        %v1167 = vextract.low.u32 %v1166
        %v1168 = vextract.high.u32 %v1166
        %v1169 = vmul.u32 %v1162, %v1153
        %v1170 = vadd.s32 %v1165, %v1167
        %vm1171 = vc.u32 %v1165, %v1167
        %v1172 = vadd.s32 %v1168, 1
        %v1173 = vsel %vm1171, %v1172, %v1168
        %v1174 = vadd.s32 %v1169, %v1173
        %v1175 = vadd.s32 %v1174, 536870912
        %v1176 = vshrl.u32 %v1175, 30
        %v1177 = vshll.u32 %v1176, 30
        %v1178 = vsub.s32 %v1174, %v1177
        %vm1179 = vcmp.lt.s32.totalorder %v1178, 0
        %v1180 = vsub.s32 0, %v1178
        %v1181 = vsel %vm1179, %v1180, %v1178
        %v1182 = vclz %v1181
        %v1183 = vsub.s32 %v1182, 2
        %vm1184 = vcmp.gt.s32.totalorder 0, %v1183
        %v1185 = vsel %vm1184, 0, %v1183
        %v1186 = vsub.s32 32, %v1185
        %v1187 = vshll.u32 %v1178, %v1185
        %v1188 = vshrl.u32 %v1170, %v1186
        %v1189 = vor.u32 %v1187, %v1188
        %v1190 = vsub.s32 4294967266, %v1185
        %v1191 = vadd.s32 %v1190, 127
        %v1192 = vshll.u32 %v1191, 23
        %v1193 = vor.u32 4788187, %v1192
        %v1194 = vand.u32 2147483647, %v1193
        %v1196 = vcvt.s32.f32 %v1189
        %v1197 = vmul.f32 %v1196, %v1194
        %v1198 = vxor.u32 %v1197, 2147483648
        %v1199 = vsel %vm1116, %v1198, %v1197
        %v1200 = vsub.s32 4, %v1176
        %v1201 = vsel %vm1116, %v1200, %v1176
        %v1202 = vsel %vm1115, %v997, %v1199
        %v1203 = vsel %vm1115, 0, %v1201
        %v1204 = vcosq.f32.pop %v1202
        %v1205 = vsinq.f32.pop %v1202
        %vm1206 = vweird.f32 %v997
        %v1207 = vadd.s32 %v1203, 3
        %v1208 = vand.u32 %v1207, 3
        %vm1209 = vcmp.lt.s32.totalorder %v1208, 2
        %vm1210 = vcmp.eq.s32.totalorder %v1208, 0
        %v1211 = vxor.u32 %v1205, 2147483648
        %v1212 = vsel %vm1210, %v1204, %v1211
        %vm1213 = vcmp.eq.s32.totalorder %v1208, 2
        %v1214 = vxor.u32 %v1204, 2147483648
        %v1215 = vsel %vm1213, %v1214, %v1205
        %v1216 = vsel %vm1209, %v1212, %v1215
        %v1217 = vsel %vm1206, nan, %v1216
        %v1218 = vand.u32 2147483647, %v1002
        %vm1219 = vcmp.le.f32.partialorder %v1218, 0.7853982
        %vm1220 = vcmp.lt.s32.totalorder %v1002, 0
        %v1221 = vand.u32 %v1002, 2139095040
        %v1222 = vshrl.u32 %v1221, 23
        %v1223 = vsub.s32 %v1222, 127
        %v1224 = vand.u32 2147483647, %v1002
        %v1225 = vand.u32 %v1224, 8388607
        %v1226 = vor.u32 %v1225, 8388608
        %v1227 = vsub.s32 0, %v1226
        %v1228 = vadd.s32 %v1223, 1
        %vm1229 = vcmp.gt.s32.totalorder %v1228, 0
        %v1230 = vsel %vm1229, %v1228, 0
        %v1231 = vshrl.u32 %v1230, 5
        %v1232 = vand.u32 %v1230, 31
        %v1233 = vsub.s32 32, %v1232
        %v1234 = vshrl.u32 683565275, %v1233
        %v1235 = vshll.u32 683565275, %v1232
        %v1236 = vshrl.u32 2475754826, %v1233
        %v1237 = vor.u32 %v1235, %v1236
        %v1238 = vshll.u32 2475754826, %v1232
        %v1239 = vshrl.u32 2131351028, %v1233
        %v1240 = vor.u32 %v1238, %v1239
        %v1241 = vshll.u32 2131351028, %v1232
        %v1242 = vshrl.u32 2102212464, %v1233
        %v1243 = vor.u32 %v1241, %v1242
        %v1244 = vshll.u32 2102212464, %v1232
        %v1245 = vshrl.u32 920167782, %v1233
        %v1246 = vor.u32 %v1244, %v1245
        %v1247 = vshll.u32 920167782, %v1232
        %v1248 = vshrl.u32 1326507024, %v1233
        %v1249 = vor.u32 %v1247, %v1248
        %vm1250 = vcmp.lt.s32.totalorder %v1231, 1
        %vm1251 = vcmp.lt.s32.totalorder %v1231, 2
        %vm1252 = vcmp.lt.s32.totalorder %v1231, 3
        %vm1253 = vcmp.lt.s32.totalorder %v1231, 4
        %v1254 = vsel %vm1250, %v1234, %v1237
        %v1255 = vsel %vm1253, %v1243, 2102212464
        %v1256 = vsel %vm1252, %v1240, %v1255
        %v1257 = vsel %vm1251, %v1254, %v1256
        %v1258 = vsel %vm1250, %v1237, %v1240
        %v1259 = vsel %vm1253, %v1246, 920167782
        %v1260 = vsel %vm1252, %v1243, %v1259
        %v1261 = vsel %vm1251, %v1258, %v1260
        %v1262 = vsel %vm1250, %v1240, %v1243
        %v1263 = vsel %vm1253, %v1249, 1326507024
        %v1264 = vsel %vm1252, %v1246, %v1263
        %v1265 = vsel %vm1251, %v1262, %v1264
        %v1266 = vshll.u32 %v1226, 8
        %v1267 = vmul.u32.u64.compose %v1266, %v1265
        %v1268 = vextract.low.u32 %v1267
        %v1269 = vextract.high.u32 %v1267
        %v1270 = vmul.u32.u64.compose %v1266, %v1261
        %v1271 = vextract.low.u32 %v1270
        %v1272 = vextract.high.u32 %v1270
        %v1273 = vmul.u32 %v1266, %v1257
        %v1274 = vadd.s32 %v1269, %v1271
        %vm1275 = vc.u32 %v1269, %v1271
        %v1276 = vadd.s32 %v1272, 1
        %v1277 = vsel %vm1275, %v1276, %v1272
        %v1278 = vadd.s32 %v1273, %v1277
        %v1279 = vadd.s32 %v1278, 536870912
        %v1280 = vshrl.u32 %v1279, 30
        %v1281 = vshll.u32 %v1280, 30
        %v1282 = vsub.s32 %v1278, %v1281
        %vm1283 = vcmp.lt.s32.totalorder %v1282, 0
        %v1284 = vsub.s32 0, %v1282
        %v1285 = vsel %vm1283, %v1284, %v1282
        %v1286 = vclz %v1285
        %v1287 = vsub.s32 %v1286, 2
        %vm1288 = vcmp.gt.s32.totalorder 0, %v1287
        %v1289 = vsel %vm1288, 0, %v1287
        %v1290 = vsub.s32 32, %v1289
        %v1291 = vshll.u32 %v1282, %v1289
        %v1292 = vshrl.u32 %v1274, %v1290
        %v1293 = vor.u32 %v1291, %v1292
        %v1294 = vsub.s32 4294967266, %v1289
        %v1295 = vadd.s32 %v1294, 127
        %v1296 = vshll.u32 %v1295, 23
        %v1297 = vor.u32 4788187, %v1296
        %v1298 = vand.u32 2147483647, %v1297
        %v1300 = vcvt.s32.f32 %v1293
        %v1301 = vmul.f32 %v1300, %v1298
        %v1302 = vxor.u32 %v1301, 2147483648
        %v1303 = vsel %vm1220, %v1302, %v1301
        %v1304 = vsub.s32 4, %v1280
        %v1305 = vsel %vm1220, %v1304, %v1280
        %v1306 = vsel %vm1219, %v1002, %v1303
        %v1307 = vsel %vm1219, 0, %v1305
        %v1308 = vcosq.f32.pop %v1306
        %v1309 = vsinq.f32.pop %v1306
        %vm1310 = vweird.f32 %v1002
        %v1311 = vadd.s32 %v1307, 3
        %v1312 = vand.u32 %v1311, 3
        %vm1313 = vcmp.lt.s32.totalorder %v1312, 2
        %vm1314 = vcmp.eq.s32.totalorder %v1312, 0
        %v1315 = vxor.u32 %v1309, 2147483648
        %v1316 = vsel %vm1314, %v1308, %v1315
        %vm1317 = vcmp.eq.s32.totalorder %v1312, 2
        %v1318 = vxor.u32 %v1308, 2147483648
        %v1319 = vsel %vm1317, %v1318, %v1309
        %v1320 = vsel %vm1313, %v1316, %v1319
        %v1321 = vsel %vm1310, nan, %v1320
        %v1322 = vand.u32 2147483647, %v1007
        %vm1323 = vcmp.le.f32.partialorder %v1322, 0.7853982
        %vm1324 = vcmp.lt.s32.totalorder %v1007, 0
        %v1325 = vand.u32 %v1007, 2139095040
        %v1326 = vshrl.u32 %v1325, 23
        %v1327 = vsub.s32 %v1326, 127
        %v1328 = vand.u32 2147483647, %v1007
        %v1329 = vand.u32 %v1328, 8388607
        %v1330 = vor.u32 %v1329, 8388608
        %v1331 = vsub.s32 0, %v1330
        %v1332 = vadd.s32 %v1327, 1
        %vm1333 = vcmp.gt.s32.totalorder %v1332, 0
        %v1334 = vsel %vm1333, %v1332, 0
        %v1335 = vshrl.u32 %v1334, 5
        %v1336 = vand.u32 %v1334, 31
        %v1337 = vsub.s32 32, %v1336
        %v1338 = vshrl.u32 683565275, %v1337
        %v1339 = vshll.u32 683565275, %v1336
        %v1340 = vshrl.u32 2475754826, %v1337
        %v1341 = vor.u32 %v1339, %v1340
        %v1342 = vshll.u32 2475754826, %v1336
        %v1343 = vshrl.u32 2131351028, %v1337
        %v1344 = vor.u32 %v1342, %v1343
        %v1345 = vshll.u32 2131351028, %v1336
        %v1346 = vshrl.u32 2102212464, %v1337
        %v1347 = vor.u32 %v1345, %v1346
        %v1348 = vshll.u32 2102212464, %v1336
        %v1349 = vshrl.u32 920167782, %v1337
        %v1350 = vor.u32 %v1348, %v1349
        %v1351 = vshll.u32 920167782, %v1336
        %v1352 = vshrl.u32 1326507024, %v1337
        %v1353 = vor.u32 %v1351, %v1352
        %vm1354 = vcmp.lt.s32.totalorder %v1335, 1
        %vm1355 = vcmp.lt.s32.totalorder %v1335, 2
        %vm1356 = vcmp.lt.s32.totalorder %v1335, 3
        %vm1357 = vcmp.lt.s32.totalorder %v1335, 4
        %v1358 = vsel %vm1354, %v1338, %v1341
        %v1359 = vsel %vm1357, %v1347, 2102212464
        %v1360 = vsel %vm1356, %v1344, %v1359
        %v1361 = vsel %vm1355, %v1358, %v1360
        %v1362 = vsel %vm1354, %v1341, %v1344
        %v1363 = vsel %vm1357, %v1350, 920167782
        %v1364 = vsel %vm1356, %v1347, %v1363
        %v1365 = vsel %vm1355, %v1362, %v1364
        %v1366 = vsel %vm1354, %v1344, %v1347
        %v1367 = vsel %vm1357, %v1353, 1326507024
        %v1368 = vsel %vm1356, %v1350, %v1367
        %v1369 = vsel %vm1355, %v1366, %v1368
        %v1370 = vshll.u32 %v1330, 8
        %v1371 = vmul.u32.u64.compose %v1370, %v1369
        %v1372 = vextract.low.u32 %v1371
        %v1373 = vextract.high.u32 %v1371
        %v1374 = vmul.u32.u64.compose %v1370, %v1365
        %v1375 = vextract.low.u32 %v1374
        %v1376 = vextract.high.u32 %v1374
        %v1377 = vmul.u32 %v1370, %v1361
        %v1378 = vadd.s32 %v1373, %v1375
        %vm1379 = vc.u32 %v1373, %v1375
        %v1380 = vadd.s32 %v1376, 1
        %v1381 = vsel %vm1379, %v1380, %v1376
        %v1382 = vadd.s32 %v1377, %v1381
        %v1383 = vadd.s32 %v1382, 536870912
        %v1384 = vshrl.u32 %v1383, 30
        %v1385 = vshll.u32 %v1384, 30
        %v1386 = vsub.s32 %v1382, %v1385
        %vm1387 = vcmp.lt.s32.totalorder %v1386, 0
        %v1388 = vsub.s32 0, %v1386
        %v1389 = vsel %vm1387, %v1388, %v1386
        %v1390 = vclz %v1389
        %v1391 = vsub.s32 %v1390, 2
        %vm1392 = vcmp.gt.s32.totalorder 0, %v1391
        %v1393 = vsel %vm1392, 0, %v1391
        %v1394 = vsub.s32 32, %v1393
        %v1395 = vshll.u32 %v1386, %v1393
        %v1396 = vshrl.u32 %v1378, %v1394
        %v1397 = vor.u32 %v1395, %v1396
        %v1398 = vsub.s32 4294967266, %v1393
        %v1399 = vadd.s32 %v1398, 127
        %v1400 = vshll.u32 %v1399, 23
        %v1401 = vor.u32 4788187, %v1400
        %v1402 = vand.u32 2147483647, %v1401
        %v1404 = vcvt.s32.f32 %v1397
        %v1405 = vmul.f32 %v1404, %v1402
        %v1406 = vxor.u32 %v1405, 2147483648
        %v1407 = vsel %vm1324, %v1406, %v1405
        %v1408 = vsub.s32 4, %v1384
        %v1409 = vsel %vm1324, %v1408, %v1384
        %v1410 = vsel %vm1323, %v1007, %v1407
        %v1411 = vsel %vm1323, 0, %v1409
        %v1412 = vcosq.f32.pop %v1410
        %v1413 = vsinq.f32.pop %v1410
        %vm1414 = vweird.f32 %v1007
        %v1415 = vadd.s32 %v1411, 3
        %v1416 = vand.u32 %v1415, 3
        %vm1417 = vcmp.lt.s32.totalorder %v1416, 2
        %vm1418 = vcmp.eq.s32.totalorder %v1416, 0
        %v1419 = vxor.u32 %v1413, 2147483648
        %v1420 = vsel %vm1418, %v1412, %v1419
        %vm1421 = vcmp.eq.s32.totalorder %v1416, 2
        %v1422 = vxor.u32 %v1412, 2147483648
        %v1423 = vsel %vm1421, %v1422, %v1413
        %v1424 = vsel %vm1417, %v1420, %v1423
        %v1425 = vsel %vm1414, nan, %v1424
        %v1426 = vmul.f32 %v1113, %v1113
        %v1427 = vmul.f32 %v1217, %v1217
        %v1428 = vmul.f32 %v1321, %v1321
        %v1429 = vmul.f32 %v1425, %v1425
        %v1430 = vadd.f32 %v992, %v1426
        %v1431 = vadd.f32 %v997, %v1427
        %v1432 = vadd.f32 %v1002, %v1428
        %v1433 = vadd.f32 %v1007, %v1429
        %v1434 = vld [vmem:[%s5] sm:$0xff]
        %v1435 = vld [vmem:[%s5 + $0x8] sm:$0xff]
        %v1436 = vld [vmem:[%s5 + $0x10] sm:$0xff]
        %v1437 = vld [vmem:[%s5 + $0x18] sm:$0xff]
        %v1438 = vld [vmem:[%s6] sm:$0xff]
        %v1439 = vld [vmem:[%s6 + $0x8] sm:$0xff]
        %v1440 = vld [vmem:[%s6 + $0x10] sm:$0xff]
        %v1441 = vld [vmem:[%s6 + $0x18] sm:$0xff]
        %1443 = vset.pattern.permute.xlu0 0
        %1444 = vperm.xlu0 %1443, %v1438
        %v1445 = vpop.permute.xlu0 %1444
        %1448 = vset.pattern.permute.xlu0 0
        %1449 = vperm.xlu0 %1448, %v1439
        %v1450 = vpop.permute.xlu0 %1449
        %1453 = vset.pattern.permute.xlu0 0
        %1454 = vperm.xlu0 %1453, %v1440
        %v1455 = vpop.permute.xlu0 %1454
        %1458 = vset.pattern.permute.xlu0 0
        %1459 = vperm.xlu0 %1458, %v1441
        %v1460 = vpop.permute.xlu0 %1459
        %v1463 = vsel %vm912, %v1434, 0
        %v1466 = vsel %vm912, %v1435, 0
        %v1469 = vsel %vm912, %v1436, 0
        %v1472 = vsel %vm912, %v1437, 0
        %1474 = vmatprep.subr.mxu0 0.0
        %1475 = vmatpush1.msra.mxu0 %v1430
        %1476 = vmatprep.subr.mxu0 0.0
        %1477 = vmatpush1.msra.mxu0 %v1431
        %1478 = vmatprep.subr.mxu0 0.0
        %1479 = vmatpush1.msra.mxu0 %v1432
        %1480 = vmatprep.subr.mxu0 0.0
        %1481 = vmatpush1.msra.mxu0 %v1433
        %1482 = vmatprep.subr.mxu0 0.0
        %1483 = vmatpush1.msra.mxu0 0.0
        %1484 = vmatprep.subr.mxu0 0.0
        %1485 = vmatpush1.msra.mxu0 0.0
        %1486 = vmatprep.subr.mxu0 0.0
        %1487 = vmatpush1.msra.mxu0 0.0
        %1488 = vmatprep.subr.mxu0 0.0
        %1489 = vmatpush1.msra.mxu0 0.0
        %1490 = vmatprep.subr.mxu0 0.0
        %1491 = vmatpush1.msra.mxu0 0.0
        %1492 = vmatprep.subr.mxu0 0.0
        %1493 = vmatpush1.msra.mxu0 0.0
        %1494 = vmatprep.subr.mxu0 0.0
        %1495 = vmatpush1.msra.mxu0 0.0
        %1496 = vmatprep.subr.mxu0 0.0
        %1497 = vmatpush1.msra.mxu0 0.0
        %1498 = vmatprep.subr.mxu0 0.0
        %1499 = vmatpush1.msra.mxu0 0.0
        %1500 = vmatprep.subr.mxu0 0.0
        %1501 = vmatpush1.msra.mxu0 0.0
        %1502 = vmatprep.subr.mxu0 0.0
        %1503 = vmatpush1.msra.mxu0 0.0
        %1504 = vmatprep.subr.mxu0 0.0
        %1505 = vmatpush1.msra.mxu0 0.0
        %1506 = vmatprep.subr.mxu0 0.0
        %1507 = vmatpush1.msra.mxu0 0.0
        %1508 = vmatprep.subr.mxu0 0.0
        %1509 = vmatpush1.msra.mxu0 0.0
        %1510 = vmatprep.subr.mxu0 0.0
        %1511 = vmatpush1.msra.mxu0 0.0
        %1512 = vmatprep.subr.mxu0 0.0
        %1513 = vmatpush1.msra.mxu0 0.0
        %1514 = vmatprep.subr.mxu0 0.0
        %1515 = vmatpush1.msra.mxu0 0.0
        %1516 = vmatprep.subr.mxu0 0.0
        %1517 = vmatpush1.msra.mxu0 0.0
        %1518 = vmatprep.subr.mxu0 0.0
        %1519 = vmatpush1.msra.mxu0 0.0
        %1520 = vmatprep.subr.mxu0 0.0
        %1521 = vmatpush1.msra.mxu0 0.0
        %1522 = vmatprep.subr.mxu0 0.0
        %1523 = vmatpush1.msra.mxu0 0.0
        %1524 = vmatprep.subr.mxu0 0.0
        %1525 = vmatpush1.msra.mxu0 0.0
        %1526 = vmatprep.subr.mxu0 0.0
        %1527 = vmatpush1.msra.mxu0 0.0
        %1528 = vmatprep.subr.mxu0 0.0
        %1529 = vmatpush1.msra.mxu0 0.0
        %1530 = vmatprep.subr.mxu0 0.0
        %1531 = vmatpush1.msra.mxu0 0.0
        %1532 = vmatprep.subr.mxu0 0.0
        %1533 = vmatpush1.msra.mxu0 0.0
        %1534 = vmatprep.subr.mxu0 0.0
        %1535 = vmatpush1.msra.mxu0 0.0
        %1536 = vmatprep.subr.mxu0 0.0
        %1537 = vmatpush1.msra.mxu0 0.0
        %1538 = vmatprep.mubr.f32.mxu0 0.0
        %1539 = vmatmul.mubr.f32.gmra.mrb[0].mxu0 %v1463
        %v1540 = vpop.f32.mrb[0].mxu0
        %v1541 = vadd.f32 %v1445, %v1540
        %v1542 = vpop.f32.mrb[0].mxu0
        %1543 = vmatprep.mubr.f32.mxu0 0.0
        %1544 = vmatmul.mubr.f32.gmra.mrb[0].mxu0 %v1466
        %v1545 = vpop.f32.mrb[0].mxu0
        %v1546 = vadd.f32 %v1450, %v1545
        %v1547 = vpop.f32.mrb[0].mxu0
        %1548 = vmatprep.mubr.f32.mxu0 0.0
        %1549 = vmatmul.mubr.f32.gmra.mrb[0].mxu0 %v1469
        %v1550 = vpop.f32.mrb[0].mxu0
        %v1551 = vadd.f32 %v1455, %v1550
        %v1552 = vpop.f32.mrb[0].mxu0
        %1553 = vmatprep.mubr.f32.mxu0 0.0
        %1554 = vmatmul.mubr.f32.gmra.mrb[0].mxu0 %v1472
        %v1555 = vpop.f32.mrb[0].mxu0
        %v1556 = vadd.f32 %v1460, %v1555
        %v1557 = vpop.f32.mrb[0].mxu0
        %1558 = vdwg.mxu0
        %v1559 = vand.u32 2147483647, %v1541
        %vm1560 = vcmp.le.f32.partialorder %v1559, 0.7853982
        %vm1561 = vcmp.lt.s32.totalorder %v1541, 0
        %v1562 = vand.u32 %v1541, 2139095040
        %v1563 = vshrl.u32 %v1562, 23
        %v1564 = vsub.s32 %v1563, 127
        %v1565 = vand.u32 2147483647, %v1541
        %v1566 = vand.u32 %v1565, 8388607
        %v1567 = vor.u32 %v1566, 8388608
        %v1568 = vsub.s32 0, %v1567
        %v1569 = vadd.s32 %v1564, 1
        %vm1570 = vcmp.gt.s32.totalorder %v1569, 0
        %v1571 = vsel %vm1570, %v1569, 0
        %v1572 = vshrl.u32 %v1571, 5
        %v1573 = vand.u32 %v1571, 31
        %v1574 = vsub.s32 32, %v1573
        %v1575 = vshrl.u32 683565275, %v1574
        %v1576 = vshll.u32 683565275, %v1573
        %v1577 = vshrl.u32 2475754826, %v1574
        %v1578 = vor.u32 %v1576, %v1577
        %v1579 = vshll.u32 2475754826, %v1573
        %v1580 = vshrl.u32 2131351028, %v1574
        %v1581 = vor.u32 %v1579, %v1580
        %v1582 = vshll.u32 2131351028, %v1573
        %v1583 = vshrl.u32 2102212464, %v1574
        %v1584 = vor.u32 %v1582, %v1583
        %v1585 = vshll.u32 2102212464, %v1573
        %v1586 = vshrl.u32 920167782, %v1574
        %v1587 = vor.u32 %v1585, %v1586
        %v1588 = vshll.u32 920167782, %v1573
        %v1589 = vshrl.u32 1326507024, %v1574
        %v1590 = vor.u32 %v1588, %v1589
        %vm1591 = vcmp.lt.s32.totalorder %v1572, 1
        %vm1592 = vcmp.lt.s32.totalorder %v1572, 2
        %vm1593 = vcmp.lt.s32.totalorder %v1572, 3
        %vm1594 = vcmp.lt.s32.totalorder %v1572, 4
        %v1595 = vsel %vm1591, %v1575, %v1578
        %v1596 = vsel %vm1594, %v1584, 2102212464
        %v1597 = vsel %vm1593, %v1581, %v1596
        %v1598 = vsel %vm1592, %v1595, %v1597
        %v1599 = vsel %vm1591, %v1578, %v1581
        %v1600 = vsel %vm1594, %v1587, 920167782
        %v1601 = vsel %vm1593, %v1584, %v1600
        %v1602 = vsel %vm1592, %v1599, %v1601
        %v1603 = vsel %vm1591, %v1581, %v1584
        %v1604 = vsel %vm1594, %v1590, 1326507024
        %v1605 = vsel %vm1593, %v1587, %v1604
        %v1606 = vsel %vm1592, %v1603, %v1605
        %v1607 = vshll.u32 %v1567, 8
        %v1608 = vmul.u32.u64.compose %v1607, %v1606
        %v1609 = vextract.low.u32 %v1608
        %v1610 = vextract.high.u32 %v1608
        %v1611 = vmul.u32.u64.compose %v1607, %v1602
        %v1612 = vextract.low.u32 %v1611
        %v1613 = vextract.high.u32 %v1611
        %v1614 = vmul.u32 %v1607, %v1598
        %v1615 = vadd.s32 %v1610, %v1612
        %vm1616 = vc.u32 %v1610, %v1612
        %v1617 = vadd.s32 %v1613, 1
        %v1618 = vsel %vm1616, %v1617, %v1613
        %v1619 = vadd.s32 %v1614, %v1618
        %v1620 = vadd.s32 %v1619, 536870912
        %v1621 = vshrl.u32 %v1620, 30
        %v1622 = vshll.u32 %v1621, 30
        %v1623 = vsub.s32 %v1619, %v1622
        %vm1624 = vcmp.lt.s32.totalorder %v1623, 0
        %v1625 = vsub.s32 0, %v1623
        %v1626 = vsel %vm1624, %v1625, %v1623
        %v1627 = vclz %v1626
        %v1628 = vsub.s32 %v1627, 2
        %vm1629 = vcmp.gt.s32.totalorder 0, %v1628
        %v1630 = vsel %vm1629, 0, %v1628
        %v1631 = vsub.s32 32, %v1630
        %v1632 = vshll.u32 %v1623, %v1630
        %v1633 = vshrl.u32 %v1615, %v1631
        %v1634 = vor.u32 %v1632, %v1633
        %v1635 = vsub.s32 4294967266, %v1630
        %v1636 = vadd.s32 %v1635, 127
        %v1637 = vshll.u32 %v1636, 23
        %v1638 = vor.u32 4788187, %v1637
        %v1639 = vand.u32 2147483647, %v1638
        %v1641 = vcvt.s32.f32 %v1634
        %v1642 = vmul.f32 %v1641, %v1639
        %v1643 = vxor.u32 %v1642, 2147483648
        %v1644 = vsel %vm1561, %v1643, %v1642
        %v1645 = vsub.s32 4, %v1621
        %v1646 = vsel %vm1561, %v1645, %v1621
        %v1647 = vsel %vm1560, %v1541, %v1644
        %v1648 = vsel %vm1560, 0, %v1646
        %v1649 = vcosq.f32.pop %v1647
        %v1650 = vsinq.f32.pop %v1647
        %vm1651 = vweird.f32 %v1541
        %v1652 = vadd.s32 %v1648, 3
        %v1653 = vand.u32 %v1652, 3
        %vm1654 = vcmp.lt.s32.totalorder %v1653, 2
        %vm1655 = vcmp.eq.s32.totalorder %v1653, 0
        %v1656 = vxor.u32 %v1650, 2147483648
        %v1657 = vsel %vm1655, %v1649, %v1656
        %vm1658 = vcmp.eq.s32.totalorder %v1653, 2
        %v1659 = vxor.u32 %v1649, 2147483648
        %v1660 = vsel %vm1658, %v1659, %v1650
        %v1661 = vsel %vm1654, %v1657, %v1660
        %v1662 = vsel %vm1651, nan, %v1661
        %v1663 = vand.u32 2147483647, %v1546
        %vm1664 = vcmp.le.f32.partialorder %v1663, 0.7853982
        %vm1665 = vcmp.lt.s32.totalorder %v1546, 0
        %v1666 = vand.u32 %v1546, 2139095040
        %v1667 = vshrl.u32 %v1666, 23
        %v1668 = vsub.s32 %v1667, 127
        %v1669 = vand.u32 2147483647, %v1546
        %v1670 = vand.u32 %v1669, 8388607
        %v1671 = vor.u32 %v1670, 8388608
        %v1672 = vsub.s32 0, %v1671
        %v1673 = vadd.s32 %v1668, 1
        %vm1674 = vcmp.gt.s32.totalorder %v1673, 0
        %v1675 = vsel %vm1674, %v1673, 0
        %v1676 = vshrl.u32 %v1675, 5
        %v1677 = vand.u32 %v1675, 31
        %v1678 = vsub.s32 32, %v1677
        %v1679 = vshrl.u32 683565275, %v1678
        %v1680 = vshll.u32 683565275, %v1677
        %v1681 = vshrl.u32 2475754826, %v1678
        %v1682 = vor.u32 %v1680, %v1681
        %v1683 = vshll.u32 2475754826, %v1677
        %v1684 = vshrl.u32 2131351028, %v1678
        %v1685 = vor.u32 %v1683, %v1684
        %v1686 = vshll.u32 2131351028, %v1677
        %v1687 = vshrl.u32 2102212464, %v1678
        %v1688 = vor.u32 %v1686, %v1687
        %v1689 = vshll.u32 2102212464, %v1677
        %v1690 = vshrl.u32 920167782, %v1678
        %v1691 = vor.u32 %v1689, %v1690
        %v1692 = vshll.u32 920167782, %v1677
        %v1693 = vshrl.u32 1326507024, %v1678
        %v1694 = vor.u32 %v1692, %v1693
        %vm1695 = vcmp.lt.s32.totalorder %v1676, 1
        %vm1696 = vcmp.lt.s32.totalorder %v1676, 2
        %vm1697 = vcmp.lt.s32.totalorder %v1676, 3
        %vm1698 = vcmp.lt.s32.totalorder %v1676, 4
        %v1699 = vsel %vm1695, %v1679, %v1682
        %v1700 = vsel %vm1698, %v1688, 2102212464
        %v1701 = vsel %vm1697, %v1685, %v1700
        %v1702 = vsel %vm1696, %v1699, %v1701
        %v1703 = vsel %vm1695, %v1682, %v1685
        %v1704 = vsel %vm1698, %v1691, 920167782
        %v1705 = vsel %vm1697, %v1688, %v1704
        %v1706 = vsel %vm1696, %v1703, %v1705
        %v1707 = vsel %vm1695, %v1685, %v1688
        %v1708 = vsel %vm1698, %v1694, 1326507024
        %v1709 = vsel %vm1697, %v1691, %v1708
        %v1710 = vsel %vm1696, %v1707, %v1709
        %v1711 = vshll.u32 %v1671, 8
        %v1712 = vmul.u32.u64.compose %v1711, %v1710
        %v1713 = vextract.low.u32 %v1712
        %v1714 = vextract.high.u32 %v1712
        %v1715 = vmul.u32.u64.compose %v1711, %v1706
        %v1716 = vextract.low.u32 %v1715
        %v1717 = vextract.high.u32 %v1715
        %v1718 = vmul.u32 %v1711, %v1702
        %v1719 = vadd.s32 %v1714, %v1716
        %vm1720 = vc.u32 %v1714, %v1716
        %v1721 = vadd.s32 %v1717, 1
        %v1722 = vsel %vm1720, %v1721, %v1717
        %v1723 = vadd.s32 %v1718, %v1722
        %v1724 = vadd.s32 %v1723, 536870912
        %v1725 = vshrl.u32 %v1724, 30
        %v1726 = vshll.u32 %v1725, 30
        %v1727 = vsub.s32 %v1723, %v1726
        %vm1728 = vcmp.lt.s32.totalorder %v1727, 0
        %v1729 = vsub.s32 0, %v1727
        %v1730 = vsel %vm1728, %v1729, %v1727
        %v1731 = vclz %v1730
        %v1732 = vsub.s32 %v1731, 2
        %vm1733 = vcmp.gt.s32.totalorder 0, %v1732
        %v1734 = vsel %vm1733, 0, %v1732
        %v1735 = vsub.s32 32, %v1734
        %v1736 = vshll.u32 %v1727, %v1734
        %v1737 = vshrl.u32 %v1719, %v1735
        %v1738 = vor.u32 %v1736, %v1737
        %v1739 = vsub.s32 4294967266, %v1734
        %v1740 = vadd.s32 %v1739, 127
        %v1741 = vshll.u32 %v1740, 23
        %v1742 = vor.u32 4788187, %v1741
        %v1743 = vand.u32 2147483647, %v1742
        %v1745 = vcvt.s32.f32 %v1738
        %v1746 = vmul.f32 %v1745, %v1743
        %v1747 = vxor.u32 %v1746, 2147483648
        %v1748 = vsel %vm1665, %v1747, %v1746
        %v1749 = vsub.s32 4, %v1725
        %v1750 = vsel %vm1665, %v1749, %v1725
        %v1751 = vsel %vm1664, %v1546, %v1748
        %v1752 = vsel %vm1664, 0, %v1750
        %v1753 = vcosq.f32.pop %v1751
        %v1754 = vsinq.f32.pop %v1751
        %vm1755 = vweird.f32 %v1546
        %v1756 = vadd.s32 %v1752, 3
        %v1757 = vand.u32 %v1756, 3
        %vm1758 = vcmp.lt.s32.totalorder %v1757, 2
        %vm1759 = vcmp.eq.s32.totalorder %v1757, 0
        %v1760 = vxor.u32 %v1754, 2147483648
        %v1761 = vsel %vm1759, %v1753, %v1760
        %vm1762 = vcmp.eq.s32.totalorder %v1757, 2
        %v1763 = vxor.u32 %v1753, 2147483648
        %v1764 = vsel %vm1762, %v1763, %v1754
        %v1765 = vsel %vm1758, %v1761, %v1764
        %v1766 = vsel %vm1755, nan, %v1765
        %v1767 = vand.u32 2147483647, %v1551
        %vm1768 = vcmp.le.f32.partialorder %v1767, 0.7853982
        %vm1769 = vcmp.lt.s32.totalorder %v1551, 0
        %v1770 = vand.u32 %v1551, 2139095040
        %v1771 = vshrl.u32 %v1770, 23
        %v1772 = vsub.s32 %v1771, 127
        %v1773 = vand.u32 2147483647, %v1551
        %v1774 = vand.u32 %v1773, 8388607
        %v1775 = vor.u32 %v1774, 8388608
        %v1776 = vsub.s32 0, %v1775
        %v1777 = vadd.s32 %v1772, 1
        %vm1778 = vcmp.gt.s32.totalorder %v1777, 0
        %v1779 = vsel %vm1778, %v1777, 0
        %v1780 = vshrl.u32 %v1779, 5
        %v1781 = vand.u32 %v1779, 31
        %v1782 = vsub.s32 32, %v1781
        %v1783 = vshrl.u32 683565275, %v1782
        %v1784 = vshll.u32 683565275, %v1781
        %v1785 = vshrl.u32 2475754826, %v1782
        %v1786 = vor.u32 %v1784, %v1785
        %v1787 = vshll.u32 2475754826, %v1781
        %v1788 = vshrl.u32 2131351028, %v1782
        %v1789 = vor.u32 %v1787, %v1788
        %v1790 = vshll.u32 2131351028, %v1781
        %v1791 = vshrl.u32 2102212464, %v1782
        %v1792 = vor.u32 %v1790, %v1791
        %v1793 = vshll.u32 2102212464, %v1781
        %v1794 = vshrl.u32 920167782, %v1782
        %v1795 = vor.u32 %v1793, %v1794
        %v1796 = vshll.u32 920167782, %v1781
        %v1797 = vshrl.u32 1326507024, %v1782
        %v1798 = vor.u32 %v1796, %v1797
        %vm1799 = vcmp.lt.s32.totalorder %v1780, 1
        %vm1800 = vcmp.lt.s32.totalorder %v1780, 2
        %vm1801 = vcmp.lt.s32.totalorder %v1780, 3
        %vm1802 = vcmp.lt.s32.totalorder %v1780, 4
        %v1803 = vsel %vm1799, %v1783, %v1786
        %v1804 = vsel %vm1802, %v1792, 2102212464
        %v1805 = vsel %vm1801, %v1789, %v1804
        %v1806 = vsel %vm1800, %v1803, %v1805
        %v1807 = vsel %vm1799, %v1786, %v1789
        %v1808 = vsel %vm1802, %v1795, 920167782
        %v1809 = vsel %vm1801, %v1792, %v1808
        %v1810 = vsel %vm1800, %v1807, %v1809
        %v1811 = vsel %vm1799, %v1789, %v1792
        %v1812 = vsel %vm1802, %v1798, 1326507024
        %v1813 = vsel %vm1801, %v1795, %v1812
        %v1814 = vsel %vm1800, %v1811, %v1813
        %v1815 = vshll.u32 %v1775, 8
        %v1816 = vmul.u32.u64.compose %v1815, %v1814
        %v1817 = vextract.low.u32 %v1816
        %v1818 = vextract.high.u32 %v1816
        %v1819 = vmul.u32.u64.compose %v1815, %v1810
        %v1820 = vextract.low.u32 %v1819
        %v1821 = vextract.high.u32 %v1819
        %v1822 = vmul.u32 %v1815, %v1806
        %v1823 = vadd.s32 %v1818, %v1820
        %vm1824 = vc.u32 %v1818, %v1820
        %v1825 = vadd.s32 %v1821, 1
        %v1826 = vsel %vm1824, %v1825, %v1821
        %v1827 = vadd.s32 %v1822, %v1826
        %v1828 = vadd.s32 %v1827, 536870912
        %v1829 = vshrl.u32 %v1828, 30
        %v1830 = vshll.u32 %v1829, 30
        %v1831 = vsub.s32 %v1827, %v1830
        %vm1832 = vcmp.lt.s32.totalorder %v1831, 0
        %v1833 = vsub.s32 0, %v1831
        %v1834 = vsel %vm1832, %v1833, %v1831
        %v1835 = vclz %v1834
        %v1836 = vsub.s32 %v1835, 2
        %vm1837 = vcmp.gt.s32.totalorder 0, %v1836
        %v1838 = vsel %vm1837, 0, %v1836
        %v1839 = vsub.s32 32, %v1838
        %v1840 = vshll.u32 %v1831, %v1838
        %v1841 = vshrl.u32 %v1823, %v1839
        %v1842 = vor.u32 %v1840, %v1841
        %v1843 = vsub.s32 4294967266, %v1838
        %v1844 = vadd.s32 %v1843, 127
        %v1845 = vshll.u32 %v1844, 23
        %v1846 = vor.u32 4788187, %v1845
        %v1847 = vand.u32 2147483647, %v1846
        %v1849 = vcvt.s32.f32 %v1842
        %v1850 = vmul.f32 %v1849, %v1847
        %v1851 = vxor.u32 %v1850, 2147483648
        %v1852 = vsel %vm1769, %v1851, %v1850
        %v1853 = vsub.s32 4, %v1829
        %v1854 = vsel %vm1769, %v1853, %v1829
        %v1855 = vsel %vm1768, %v1551, %v1852
        %v1856 = vsel %vm1768, 0, %v1854
        %v1857 = vcosq.f32.pop %v1855
        %v1858 = vsinq.f32.pop %v1855
        %vm1859 = vweird.f32 %v1551
        %v1860 = vadd.s32 %v1856, 3
        %v1861 = vand.u32 %v1860, 3
        %vm1862 = vcmp.lt.s32.totalorder %v1861, 2
        %vm1863 = vcmp.eq.s32.totalorder %v1861, 0
        %v1864 = vxor.u32 %v1858, 2147483648
        %v1865 = vsel %vm1863, %v1857, %v1864
        %vm1866 = vcmp.eq.s32.totalorder %v1861, 2
        %v1867 = vxor.u32 %v1857, 2147483648
        %v1868 = vsel %vm1866, %v1867, %v1858
        %v1869 = vsel %vm1862, %v1865, %v1868
        %v1870 = vsel %vm1859, nan, %v1869
        %v1871 = vand.u32 2147483647, %v1556
        %vm1872 = vcmp.le.f32.partialorder %v1871, 0.7853982
        %vm1873 = vcmp.lt.s32.totalorder %v1556, 0
        %v1874 = vand.u32 %v1556, 2139095040
        %v1875 = vshrl.u32 %v1874, 23
        %v1876 = vsub.s32 %v1875, 127
        %v1877 = vand.u32 2147483647, %v1556
        %v1878 = vand.u32 %v1877, 8388607
        %v1879 = vor.u32 %v1878, 8388608
        %v1880 = vsub.s32 0, %v1879
        %v1881 = vadd.s32 %v1876, 1
        %vm1882 = vcmp.gt.s32.totalorder %v1881, 0
        %v1883 = vsel %vm1882, %v1881, 0
        %v1884 = vshrl.u32 %v1883, 5
        %v1885 = vand.u32 %v1883, 31
        %v1886 = vsub.s32 32, %v1885
        %v1887 = vshrl.u32 683565275, %v1886
        %v1888 = vshll.u32 683565275, %v1885
        %v1889 = vshrl.u32 2475754826, %v1886
        %v1890 = vor.u32 %v1888, %v1889
        %v1891 = vshll.u32 2475754826, %v1885
        %v1892 = vshrl.u32 2131351028, %v1886
        %v1893 = vor.u32 %v1891, %v1892
        %v1894 = vshll.u32 2131351028, %v1885
        %v1895 = vshrl.u32 2102212464, %v1886
        %v1896 = vor.u32 %v1894, %v1895
        %v1897 = vshll.u32 2102212464, %v1885
        %v1898 = vshrl.u32 920167782, %v1886
        %v1899 = vor.u32 %v1897, %v1898
        %v1900 = vshll.u32 920167782, %v1885
        %v1901 = vshrl.u32 1326507024, %v1886
        %v1902 = vor.u32 %v1900, %v1901
        %vm1903 = vcmp.lt.s32.totalorder %v1884, 1
        %vm1904 = vcmp.lt.s32.totalorder %v1884, 2
        %vm1905 = vcmp.lt.s32.totalorder %v1884, 3
        %vm1906 = vcmp.lt.s32.totalorder %v1884, 4
        %v1907 = vsel %vm1903, %v1887, %v1890
        %v1908 = vsel %vm1906, %v1896, 2102212464
        %v1909 = vsel %vm1905, %v1893, %v1908
        %v1910 = vsel %vm1904, %v1907, %v1909
        %v1911 = vsel %vm1903, %v1890, %v1893
        %v1912 = vsel %vm1906, %v1899, 920167782
        %v1913 = vsel %vm1905, %v1896, %v1912
        %v1914 = vsel %vm1904, %v1911, %v1913
        %v1915 = vsel %vm1903, %v1893, %v1896
        %v1916 = vsel %vm1906, %v1902, 1326507024
        %v1917 = vsel %vm1905, %v1899, %v1916
        %v1918 = vsel %vm1904, %v1915, %v1917
        %v1919 = vshll.u32 %v1879, 8
        %v1920 = vmul.u32.u64.compose %v1919, %v1918
        %v1921 = vextract.low.u32 %v1920
        %v1922 = vextract.high.u32 %v1920
        %v1923 = vmul.u32.u64.compose %v1919, %v1914
        %v1924 = vextract.low.u32 %v1923
        %v1925 = vextract.high.u32 %v1923
        %v1926 = vmul.u32 %v1919, %v1910
        %v1927 = vadd.s32 %v1922, %v1924
        %vm1928 = vc.u32 %v1922, %v1924
        %v1929 = vadd.s32 %v1925, 1
        %v1930 = vsel %vm1928, %v1929, %v1925
        %v1931 = vadd.s32 %v1926, %v1930
        %v1932 = vadd.s32 %v1931, 536870912
        %v1933 = vshrl.u32 %v1932, 30
        %v1934 = vshll.u32 %v1933, 30
        %v1935 = vsub.s32 %v1931, %v1934
        %vm1936 = vcmp.lt.s32.totalorder %v1935, 0
        %v1937 = vsub.s32 0, %v1935
        %v1938 = vsel %vm1936, %v1937, %v1935
        %v1939 = vclz %v1938
        %v1940 = vsub.s32 %v1939, 2
        %vm1941 = vcmp.gt.s32.totalorder 0, %v1940
        %v1942 = vsel %vm1941, 0, %v1940
        %v1943 = vsub.s32 32, %v1942
        %v1944 = vshll.u32 %v1935, %v1942
        %v1945 = vshrl.u32 %v1927, %v1943
        %v1946 = vor.u32 %v1944, %v1945
        %v1947 = vsub.s32 4294967266, %v1942
        %v1948 = vadd.s32 %v1947, 127
        %v1949 = vshll.u32 %v1948, 23
        %v1950 = vor.u32 4788187, %v1949
        %v1951 = vand.u32 2147483647, %v1950
        %v1953 = vcvt.s32.f32 %v1946
        %v1954 = vmul.f32 %v1953, %v1951
        %v1955 = vxor.u32 %v1954, 2147483648
        %v1956 = vsel %vm1873, %v1955, %v1954
        %v1957 = vsub.s32 4, %v1933
        %v1958 = vsel %vm1873, %v1957, %v1933
        %v1959 = vsel %vm1872, %v1556, %v1956
        %v1960 = vsel %vm1872, 0, %v1958
        %v1961 = vcosq.f32.pop %v1959
        %v1962 = vsinq.f32.pop %v1959
        %vm1963 = vweird.f32 %v1556
        %v1964 = vadd.s32 %v1960, 3
        %v1965 = vand.u32 %v1964, 3
        %vm1966 = vcmp.lt.s32.totalorder %v1965, 2
        %vm1967 = vcmp.eq.s32.totalorder %v1965, 0
        %v1968 = vxor.u32 %v1962, 2147483648
        %v1969 = vsel %vm1967, %v1961, %v1968
        %vm1970 = vcmp.eq.s32.totalorder %v1965, 2
        %v1971 = vxor.u32 %v1961, 2147483648
        %v1972 = vsel %vm1970, %v1971, %v1962
        %v1973 = vsel %vm1966, %v1969, %v1972
        %v1974 = vsel %vm1963, nan, %v1973
        %v1975 = vmul.f32 %v1662, %v1662
        %v1976 = vmul.f32 %v1766, %v1766
        %v1977 = vmul.f32 %v1870, %v1870
        %v1978 = vmul.f32 %v1974, %v1974
        %v1979 = vadd.f32 %v1541, %v1975
        %v1980 = vadd.f32 %v1546, %v1976
        %v1981 = vadd.f32 %v1551, %v1977
        %v1982 = vadd.f32 %v1556, %v1978
        %v1983 = vld [vmem:[%s7] sm:$0x1]
        %v1984 = vld [vmem:[#allocation2] sm:$0x1]
        %1986 = vset.pattern.permute.xlu0 0
        %1987 = vperm.xlu0 %1986, %v1984
        %v1988 = vpop.permute.xlu0 %1987
        %v1990 = vlaneseq
        %v1991 = vshrl.u32 %v1990, 7
        %v1992 = vsub.s32 0, %v1991
        %v1993 = vrot.slane %v1988, %v1992
        %v1995 = vsel %vm912, %v1983, 0
        %1997 = vmatprep.subr.mxu0 0.0
        %1998 = vmatpush1.msra.mxu0 %v1979
        %1999 = vmatprep.subr.mxu0 0.0
        %2000 = vmatpush1.msra.mxu0 %v1980
        %2001 = vmatprep.subr.mxu0 0.0
        %2002 = vmatpush1.msra.mxu0 %v1981
        %2003 = vmatprep.subr.mxu0 0.0
        %2004 = vmatpush1.msra.mxu0 %v1982
        %2005 = vmatprep.subr.mxu0 0.0
        %2006 = vmatpush1.msra.mxu0 0.0
        %2007 = vmatprep.subr.mxu0 0.0
        %2008 = vmatpush1.msra.mxu0 0.0
        %2009 = vmatprep.subr.mxu0 0.0
        %2010 = vmatpush1.msra.mxu0 0.0
        %2011 = vmatprep.subr.mxu0 0.0
        %2012 = vmatpush1.msra.mxu0 0.0
        %2013 = vmatprep.subr.mxu0 0.0
        %2014 = vmatpush1.msra.mxu0 0.0
        %2015 = vmatprep.subr.mxu0 0.0
        %2016 = vmatpush1.msra.mxu0 0.0
        %2017 = vmatprep.subr.mxu0 0.0
        %2018 = vmatpush1.msra.mxu0 0.0
        %2019 = vmatprep.subr.mxu0 0.0
        %2020 = vmatpush1.msra.mxu0 0.0
        %2021 = vmatprep.subr.mxu0 0.0
        %2022 = vmatpush1.msra.mxu0 0.0
        %2023 = vmatprep.subr.mxu0 0.0
        %2024 = vmatpush1.msra.mxu0 0.0
        %2025 = vmatprep.subr.mxu0 0.0
        %2026 = vmatpush1.msra.mxu0 0.0
        %2027 = vmatprep.subr.mxu0 0.0
        %2028 = vmatpush1.msra.mxu0 0.0
        %2029 = vmatprep.subr.mxu0 0.0
        %2030 = vmatpush1.msra.mxu0 0.0
        %2031 = vmatprep.subr.mxu0 0.0
        %2032 = vmatpush1.msra.mxu0 0.0
        %2033 = vmatprep.subr.mxu0 0.0
        %2034 = vmatpush1.msra.mxu0 0.0
        %2035 = vmatprep.subr.mxu0 0.0
        %2036 = vmatpush1.msra.mxu0 0.0
        %2037 = vmatprep.subr.mxu0 0.0
        %2038 = vmatpush1.msra.mxu0 0.0
        %2039 = vmatprep.subr.mxu0 0.0
        %2040 = vmatpush1.msra.mxu0 0.0
        %2041 = vmatprep.subr.mxu0 0.0
        %2042 = vmatpush1.msra.mxu0 0.0
        %2043 = vmatprep.subr.mxu0 0.0
        %2044 = vmatpush1.msra.mxu0 0.0
        %2045 = vmatprep.subr.mxu0 0.0
        %2046 = vmatpush1.msra.mxu0 0.0
        %2047 = vmatprep.subr.mxu0 0.0
        %2048 = vmatpush1.msra.mxu0 0.0
        %2049 = vmatprep.subr.mxu0 0.0
        %2050 = vmatpush1.msra.mxu0 0.0
        %2051 = vmatprep.subr.mxu0 0.0
        %2052 = vmatpush1.msra.mxu0 0.0
        %2053 = vmatprep.subr.mxu0 0.0
        %2054 = vmatpush1.msra.mxu0 0.0
        %2055 = vmatprep.subr.mxu0 0.0
        %2056 = vmatpush1.msra.mxu0 0.0
        %2057 = vmatprep.subr.mxu0 0.0
        %2058 = vmatpush1.msra.mxu0 0.0
        %2059 = vmatprep.subr.mxu0 0.0
        %2060 = vmatpush1.msra.mxu0 0.0
        %2061 = vmatprep.mubr.f32.mxu0 0.0
        %2062 = vmatmul.mubr.f32.gmra.mrb[0].mxu0 %v1995
        %v2063 = vpop.f32.mrb[0].mxu0
        %v2064 = vadd.f32 %v1993, %v2063
        %v2065 = vpop.f32.mrb[0].mxu0
        %2066 = vdwg.mxu0
        %2067 = vst [vmem:[%s324] sm:$0x1] %v2064
        %s2068 = sand.u32 %s227, 1
        %s2069 = scalar_lea.sflag [#allocation4], %s2068
        %s2070 = sand.u32 %s227, 1
        %s2071 = scalar_lea.vmem [#allocation3], %s2070
        // Predicated region
        $region57: #{tpu_custom_call.1} parent=55 // pred_check
          %p2072 = pneg %p237
        $region58: #{tpu_custom_call.1} parent=55 // pred_check_branch
          %2074 = sbr.rel (%p2072) target = $region60
        $region59: #{tpu_custom_call.1} parent=55 // pred_region
          %s2076 = ssub.s32 16, 16
          %2077 = vsyncadd %s2069, %s2076
          %s2078 = smul.addr %s25, 16
          %s2079 = scalar_lea.hbm %s9, %s2078
          %s2081 = sshll.u32 %s2071, 4
          %s2082 = int_to_ptr.vmem [resolvable:$true] %s2081
          %2084 = dma.vmem_to_hbm [thread:$0]  %s2082, 16, %s2079, %s2069
        $region60: #{tpu_custom_call.1} parent=55 // pred_fallthru
          _
      $region56: #{tpu_custom_call.1} parent=5 // pred_fallthru
        _
      %p2085 = scmp.le.s32.totalorder 2, %s20
      // Predicated region
      $region61: #{tpu_custom_call.1} parent=5 // pred_check
        %p2086 = pneg %p2085
      $region62: #{tpu_custom_call.1} parent=5 // pred_check_branch
        %2088 = sbr.rel (%p2086) target = $region64
      $region63: #{tpu_custom_call.1} parent=5 // pred_region
        %s2089 = ssub.s32 %s20, 2
        // Predicated region
        $region65: #{tpu_custom_call.1} parent=63 // pred_check
          %p2090 = pneg %p243
        $region66: #{tpu_custom_call.1} parent=63 // pred_check_branch
          %2092 = sbr.rel (%p2090) target = $region68
        $region67: #{tpu_custom_call.1} parent=63 // pred_region
          %s2093 = sand.u32 %s228, 1
          %s2094 = scalar_lea.sflag [#allocation4], %s2093
          %s2095 = sand.u32 %s228, 1
          %s2096 = scalar_lea.vmem [#allocation3], %s2095
          %2097 = dma.done %s2094, 16
        $region68: #{tpu_custom_call.1} parent=63 // pred_fallthru
          _
      $region64: #{tpu_custom_call.1} parent=5 // pred_fallthru
        _
    $region6: #{tpu_custom_call.1} parent=1 // loop_footer
      %s24 = sadd.s32 1, %s20
    $region7: #{tpu_custom_call.1} parent=1 // loop_footer_branch
      %19 = sbr.rel target = $region3
    $region8: #{tpu_custom_call.1} parent=1 // loop_exit
      _
    %2098 = vsyncpa [#allocation4], 1
    %s2099 = scalar_lea.sflag [#allocation4], 1
    %2100 = vsyncpa %s2099, 1

</llo_original>
